<compile_context>
chip_gen: v7x
topology: tpu7x:2x2x1
jax: 0.10.0
libtpu: 0.0.40
codegen_flags: <defaults>
</compile_context>

<pallas_src>
import functools
import math

import jax
import jax.numpy as jnp
from jax.experimental import pallas as pl
from jax.experimental.pallas import tpu as pltpu


def _round_up(x, m):
    return ((x + m - 1) // m) * m


def _vmem_budget(frac=0.75, fallback=48 << 20):
    """Scoped-VMEM budget: 75% of physical VMEM (96 MiB v5e/v6e, 48 MiB v7x)."""
    try:
        info = pltpu.get_tpu_info()
        cap = getattr(info, "vmem_capacity_bytes", None)
        if cap is None:
            return fallback
        return int(cap * frac)
    except Exception:
        return fallback


# ----------------------------------------------------------------------------
# Kernel 1 (fused, flash-style):
#   memory[n]  = x[n] @ Wc + bc                          (1x1 conv)
#   s[c, n]    = q_scaled[c] . (memory[n] + pos[n])      (attention logits)
#   attn       = softmax_n(s)        (online, streamed over N tiles)
#   hs[c]      = sum_n attn[c, n] * memory[n]            (weighted sum)
# Grid: (B, N//tile_n); B parallel, N arbitrary (reduction with VMEM scratch).
# Neither `memory` nor the logits ever touch HBM.
# ----------------------------------------------------------------------------
def _fused_proj_attn_kernel(x_ref, pos_ref, w_ref, b_ref, q_ref, hs_ref,
                            m_sc, l_sc, acc_sc, *, n_total, tile_n, need_mask):
    j = pl.program_id(1)

    @pl.when(j == 0)
    def _():
        m_sc[...] = jnp.full(m_sc.shape, -jnp.inf, m_sc.dtype)
        l_sc[...] = jnp.zeros(l_sc.shape, l_sc.dtype)
        acc_sc[...] = jnp.zeros(acc_sc.shape, acc_sc.dtype)

    x = x_ref[0]                                                 # (tile_n, Cin) bf16
    mem = jnp.dot(x, w_ref[...],
                  preferred_element_type=jnp.float32) + b_ref[...]  # (tile_n, D) f32
    mem_pos = (mem + pos_ref[0]).astype(jnp.bfloat16)            # (tile_n, D) bf16

    # s[c, n] = q_scaled[c, :] . mem_pos[n, :]   -> (C, tile_n), lane axis = n
    s = jax.lax.dot_general(q_ref[...], mem_pos,
                            dimension_numbers=(((1,), (1,)), ((), ())),
                            preferred_element_type=jnp.float32)

    if need_mask:
        # zero-padded tail rows must not enter the softmax denominator
        col = jax.lax.broadcasted_iota(jnp.int32, s.shape, 1) + j * tile_n
        s = jnp.where(col < n_total, s, -jnp.inf)

    m_prev = m_sc[...]                                           # (C, 1)
    m_new = jnp.maximum(m_prev, s.max(axis=-1, keepdims=True))
    alpha = jnp.exp(m_prev - m_new)                              # (C, 1)
    p = jnp.exp(s - m_new)                                       # (C, tile_n)
    l_sc[...] = alpha * l_sc[...] + p.sum(axis=-1, keepdims=True)
    acc_sc[...] = alpha * acc_sc[...] + jnp.dot(
        p.astype(jnp.bfloat16), mem.astype(jnp.bfloat16),
        preferred_element_type=jnp.float32)                      # (C, D)
    m_sc[...] = m_new

    @pl.when(j == pl.num_programs(1) - 1)
    def _():
        hs_ref[0] = acc_sc[...] * pl.reciprocal(l_sc[...], approx=True)


def fused_proj_attention(x, pos, w, bias, query, *, tile_n=1024):
    """x: (B, N, Cin) bf16, pos: (B, N, D) bf16 -> hs: (B, C, D) f32."""
    bsz, n, cin = x.shape
    d = w.shape[1]
    c = query.shape[0]

    tile_n = min(tile_n, _round_up(n, 8))
    tile_n = _round_up(tile_n, 8)
    n_pad = _round_up(n, tile_n)
    if n_pad != n:
        x = jnp.pad(x, ((0, 0), (0, n_pad - n), (0, 0)))
        pos = jnp.pad(pos, ((0, 0), (0, n_pad - n), (0, 0)))

    # bf16 MXU operands prepared once host-side; the 1/sqrt(D) attention scale
    # is folded into the query matrix.
    w_bf = w.astype(jnp.bfloat16)
    q_scaled = (query / math.sqrt(d)).astype(jnp.bfloat16)

    grid = (bsz, n_pad // tile_n)
    kernel = functools.partial(_fused_proj_attn_kernel, n_total=n,
                               tile_n=tile_n, need_mask=(n_pad != n))

    flops = bsz * n_pad * (2 * cin * d + 4 * c * d) + bsz * n_pad * d
    transcendentals = bsz * n_pad * c
    bytes_accessed = (2 * (x.size + pos.size)          # bf16 activation tiles
                      + 2 * (w_bf.size + q_scaled.size)
                      + 4 * bias.size
                      + 4 * bsz * c * d)               # hs output

    hs = pl.pallas_call(
        kernel,
        out_shape=jax.ShapeDtypeStruct((bsz, c, d), jnp.float32),
        grid=grid,
        in_specs=[
            pl.BlockSpec((1, tile_n, cin), lambda i, j: (i, j, 0)),  # x tile
            pl.BlockSpec((1, tile_n, d), lambda i, j: (i, j, 0)),    # pos tile
            pl.BlockSpec((cin, d), lambda i, j: (0, 0)),             # conv W (resident)
            pl.BlockSpec((1, d), lambda i, j: (0, 0)),               # conv b (resident)
            pl.BlockSpec((c, d), lambda i, j: (0, 0)),               # scaled query (resident)
        ],
        out_specs=pl.BlockSpec((1, c, d), lambda i, j: (i, 0, 0)),   # hs (accumulated)
        scratch_shapes=[
            pltpu.VMEM((c, 1), jnp.float32),    # running max
            pltpu.VMEM((c, 1), jnp.float32),    # running denom
            pltpu.VMEM((c, d), jnp.float32),    # running weighted sum
        ],
        compiler_params=pltpu.CompilerParams(
            dimension_semantics=("parallel", "arbitrary"),
            vmem_limit_bytes=_vmem_budget()),
        cost_estimate=pl.CostEstimate(flops=int(flops),
                                      transcendentals=int(transcendentals),
                                      bytes_accessed=int(bytes_accessed)),
    )(x, pos, w_bf, bias, q_scaled)
    return hs


# ----------------------------------------------------------------------------
# Kernel 2: VIB head, whole batch in one grid step (B*C-row matmuls).
#   t1     = ReLU(hs @ W1 + b1)
#   z_mu   = t1 @ W2_mu  + b2_mu          (W2 split + F padded to 128 lanes
#   z_std  = softplus(t1 @ W2_std + b2_std)   host-side -> lane-dense I/O)
#   z      = z_mu + z_std * eps           (eps ~ N(0, 1/10) == mean of 10 rsamples)
#   out    = (W_fc * z).sum(-1) + b_fc    (GroupWiseLinear; padded fc cols are 0)
# ----------------------------------------------------------------------------
def _vib_head_kernel(hs_ref, eps_ref, w1_ref, b1_ref, w2m_ref, b2m_ref,
                     w2s_ref, b2s_ref, wfc_ref, bfc_ref,
                     out_ref, mu_ref, std_ref):
    tb, c, d = hs_ref.shape
    f_pad = mu_ref.shape[-1]

    h = hs_ref[...].reshape(tb * c, d).astype(jnp.bfloat16)          # (TB*C, D)
    t1 = jnp.dot(h, w1_ref[...], preferred_element_type=jnp.float32) + b1_ref[...]
    t1 = jnp.maximum(t1, 0.0).astype(jnp.bfloat16)                   # ReLU

    mu = jnp.dot(t1, w2m_ref[...], preferred_element_type=jnp.float32) + b2m_ref[...]
    pre = jnp.dot(t1, w2s_ref[...], preferred_element_type=jnp.float32) + b2s_ref[...]
    # numerically stable softplus: max(x, 0) + log(1 + exp(-|x|))
    std = jnp.maximum(pre, 0.0) + jnp.log(1.0 + jnp.exp(-jnp.abs(pre)))

    z = mu + std * eps_ref[...].reshape(tb * c, f_pad)               # (TB*C, F_pad)

    mu_ref[...] = mu.reshape(tb, c, f_pad)
    std_ref[...] = std.reshape(tb, c, f_pad)

    # GroupWiseLinear: per-class weight dotted with its feature vector.
    # Padded fc_w columns are 0, so the sum over F_pad equals the sum over F.
    z3 = z.reshape(tb, c, f_pad)
    gwl = jnp.sum(wfc_ref[...][None, :, :] * z3, axis=-1)            # (TB, C)
    out_ref[...] = gwl + bfc_ref[...]


def vib_head(hs, eps, params):
    b, c, d = hs.shape
    f = params["fc_w"].shape[-1]
    f_pad = _round_up(f, 128)

    # Host-side weight prep: bf16 MXU operands, W2 split into mu/std halves,
    # feat_dim padded to a 128-lane slab with exact zeros (math unchanged).
    pad_f = ((0, 0), (0, f_pad - f))
    w1_bf = params["w1"].astype(jnp.bfloat16)
    w2m_bf = jnp.pad(params["w2"][:, :f], pad_f).astype(jnp.bfloat16)
    w2s_bf = jnp.pad(params["w2"][:, f:], pad_f).astype(jnp.bfloat16)
    b2m = jnp.pad(params["b2"][:, :f], pad_f)
    b2s = jnp.pad(params["b2"][:, f:], pad_f)
    wfc = jnp.pad(params["fc_w"], pad_f)
    eps_pad = jnp.pad(eps, ((0, 0), (0, 0), (0, f_pad - f)))

    flops = b * c * (2 * d * d + 4 * d * f_pad) + 8 * b * c * f_pad
    transcendentals = 2 * b * c * f_pad
    bytes_accessed = (4 * (hs.size + eps_pad.size + params["b1"].size
                           + b2m.size + b2s.size + wfc.size + params["fc_b"].size)
                      + 2 * (w1_bf.size + w2m_bf.size + w2s_bf.size)
                      + 4 * (b * c + 2 * b * c * f_pad))

    out_shapes = (
        jax.ShapeDtypeStruct((b, c), jnp.float32),          # GroupWiseLinear logits
        jax.ShapeDtypeStruct((b, c, f_pad), jnp.float32),   # z_mu  (lane-padded)
        jax.ShapeDtypeStruct((b, c, f_pad), jnp.float32),   # z_std (lane-padded)
    )
    # TODO(synk): for production batch sizes, tile the batch axis in multiples
    # of 8 instead of a single grid step.
    out, z_mu_p, z_std_p = pl.pallas_call(
        _vib_head_kernel,
        out_shape=out_shapes,
        grid=(1,),
        in_specs=[
            pl.BlockSpec((b, c, d), lambda i: (0, 0, 0)),       # hs (whole batch)
            pl.BlockSpec((b, c, f_pad), lambda i: (0, 0, 0)),   # eps
            pl.BlockSpec((d, d), lambda i: (0, 0)),             # W1
            pl.BlockSpec((1, d), lambda i: (0, 0)),             # b1
            pl.BlockSpec((d, f_pad), lambda i: (0, 0)),         # W2_mu
            pl.BlockSpec((1, f_pad), lambda i: (0, 0)),         # b2_mu
            pl.BlockSpec((d, f_pad), lambda i: (0, 0)),         # W2_std
            pl.BlockSpec((1, f_pad), lambda i: (0, 0)),         # b2_std
            pl.BlockSpec((c, f_pad), lambda i: (0, 0)),         # GroupWiseLinear W
            pl.BlockSpec((1, c), lambda i: (0, 0)),             # GroupWiseLinear b
        ],
        out_specs=(
            pl.BlockSpec((b, c), lambda i: (0, 0)),
            pl.BlockSpec((b, c, f_pad), lambda i: (0, 0, 0)),
            pl.BlockSpec((b, c, f_pad), lambda i: (0, 0, 0)),
        ),
        compiler_params=pltpu.CompilerParams(
            dimension_semantics=("arbitrary",),
            vmem_limit_bytes=_vmem_budget()),
        cost_estimate=pl.CostEstimate(flops=int(flops),
                                      transcendentals=int(transcendentals),
                                      bytes_accessed=int(bytes_accessed)),
    )(hs, eps_pad, w1_bf, params["b1"], w2m_bf, b2m, w2s_bf, b2s,
      wfc, params["fc_b"])
    return out, z_mu_p[..., :f], z_std_p[..., :f]


# ----------------------------------------------------------------------------
# Parameter construction (deterministic, mirrors __init__ shapes).
# ----------------------------------------------------------------------------
def make_params(key, backbone_channels, hidden_dim, num_class, feat_dim):
    ks = jax.random.split(key, 8)

    def unif(k, shape, bound):
        return jax.random.uniform(k, shape, jnp.float32, -bound, bound)

    kconv = 1.0 / math.sqrt(backbone_channels)
    klin = 1.0 / math.sqrt(hidden_dim)
    p = {
        # input_proj: Conv2d(backbone_channels, hidden_dim, kernel_size=1)
        "proj_w": unif(ks[0], (backbone_channels, hidden_dim), kconv),
        "proj_b": unif(ks[1], (1, hidden_dim), kconv),
        # query_embed: Embedding(num_class, hidden_dim)
        "query": jax.random.normal(ks[2], (num_class, hidden_dim), jnp.float32),
        # proj MLP: Linear(hidden, hidden) ; Linear(hidden, 2*feat_dim)
        "w1": unif(ks[3], (hidden_dim, hidden_dim), klin),
        "b1": unif(ks[4], (1, hidden_dim), klin),
        "w2": unif(ks[5], (hidden_dim, 2 * feat_dim), klin),
        "b2": unif(ks[6], (1, 2 * feat_dim), klin),
    }
    # GroupWiseLinear fc: W (1, num_class, feat_dim), b (1, num_class)
    kfc1, kfc2 = jax.random.split(ks[7])
    stdv = 1.0 / math.sqrt(feat_dim)
    p["fc_w"] = unif(kfc1, (num_class, feat_dim), stdv)
    p["fc_b"] = unif(kfc2, (1, num_class), stdv)
    return p


# ----------------------------------------------------------------------------
# Full forward (hot paths in Pallas, only layout prep + eps draw in XLA).
# ----------------------------------------------------------------------------
def lemodel_vib_forward(src_nchw, pos_nchw, params, sample_key, feat_dim,
                        tile_n=1024):
    bsz, cb, hh, ww = src_nchw.shape
    d = params["proj_w"].shape[1]
    c = params["query"].shape[0]
    n = hh * ww

    # backbone stand-in: src IS the feature map; go channels-last, flatten HW,
    # cast to bf16 (XLA fuses the cast into the transpose copy).
    x = jnp.transpose(src_nchw, (0, 2, 3, 1)).reshape(bsz, n, cb)
    x = x.astype(jnp.bfloat16)
    pos = jnp.transpose(pos_nchw, (0, 2, 3, 1)).reshape(bsz, n, d)
    pos = pos.astype(jnp.bfloat16)

    # --- Pallas kernel 1: conv + pos + logits + online softmax + weighted sum.
    hs = fused_proj_attention(x, pos, params["proj_w"], params["proj_b"],
                              params["query"], tile_n=tile_n)

    # mean of 10 reparameterized N(mu, std) samples == mu + std * eps with
    # eps ~ N(0, 1/10): a single draw (no 10x buffer / reduction).
    eps = jax.random.normal(sample_key, (bsz, c, feat_dim), jnp.float32)
    eps = eps * (1.0 / math.sqrt(10.0))

    # --- Pallas kernel 2: VIB head.
    return vib_head(hs, eps, params)


# ----------------------------------------------------------------------------
# Plain-JAX f32 reference (same math, for a loose numerical check).
# ----------------------------------------------------------------------------
def reference_forward(src_nchw, pos_nchw, params, sample_key, feat_dim):
    bsz, cb, hh, ww = src_nchw.shape
    d = params["proj_w"].shape[1]
    c = params["query"].shape[0]
    x = jnp.transpose(src_nchw, (0, 2, 3, 1)).reshape(bsz, hh * ww, cb)
    memory = jnp.einsum("bnc,cd->bnd", x, params["proj_w"]) + params["proj_b"][0]
    posf = jnp.transpose(pos_nchw, (0, 2, 3, 1)).reshape(bsz, hh * ww, d)
    logits = jnp.einsum("cd,bnd->bcn", params["query"], memory + posf) / math.sqrt(d)
    attn = jax.nn.softmax(logits, axis=-1)
    hs = jnp.einsum("bcn,bnd->bcd", attn, memory)
    t1 = jax.nn.relu(jnp.einsum("bcd,de->bce", hs, params["w1"]) + params["b1"][0])
    stats = jnp.einsum("bce,ef->bcf", t1, params["w2"]) + params["b2"][0]
    z_mu = stats[..., :feat_dim]
    z_std = jax.nn.softplus(stats[..., feat_dim:])
    eps = jax.random.normal(sample_key, (bsz, c, feat_dim), jnp.float32)
    eps = eps * (1.0 / math.sqrt(10.0))
    z = z_mu + z_std * eps
    out = jnp.sum(params["fc_w"][None] * z, axis=-1) + params["fc_b"]
    return out, z_mu, z_std


if __name__ == "__main__":
    # Small, forward-consistent shapes.
    B, Cb, H, W = 2, 16, 16, 16      # batch, backbone channels, spatial
    D = 32                           # encoder d_model (hidden_dim)
    num_class = 8
    feat_dim = 16

    root = jax.random.PRNGKey(0)
    k_src, k_pos, k_par, k_smp = jax.random.split(root, 4)

    src = jax.random.normal(k_src, (B, Cb, H, W), jnp.float32)
    pos = 0.1 * jax.random.normal(k_pos, (B, D, H, W), jnp.float32)
    params = make_params(k_par, Cb, D, num_class, feat_dim)

    # tile_n=128 at these toy shapes so kernel 1 runs a real 2-step online-
    # softmax reduction per batch element (production default is 1024).
    fwd = jax.jit(functools.partial(lemodel_vib_forward,
                                    feat_dim=feat_dim, tile_n=128))
    out, z_mu, z_std = fwd(src, pos, params, k_smp)
    jax.block_until_ready((out, z_mu, z_std))

    assert out.shape == (B, num_class)
    assert z_mu.shape == (B, num_class, feat_dim)
    assert z_std.shape == (B, num_class, feat_dim)
    assert bool(jnp.all(z_std > 0.0))
    assert bool(jnp.all(jnp.isfinite(out)))

    # Loose check vs plain-JAX f32 reference (kernels use bf16 MXU operands).
    out_r, mu_r, std_r = reference_forward(src, pos, params, k_smp, feat_dim)
    assert bool(jnp.allclose(out, out_r, atol=5e-2, rtol=5e-2))
    assert bool(jnp.allclose(z_mu, mu_r, atol=5e-2, rtol=5e-2))
    assert bool(jnp.allclose(z_std, std_r, atol=5e-2, rtol=5e-2))

    print("KERNEL_OK")
</pallas_src>

<mosaic_0001>
module attributes {stable_mosaic.version = 11 : i64} {
  func.func @_fused_proj_attn_kernel(%arg0: i32, %arg1: i32, %arg2: memref<1x128x16xbf16, #tpu.memory_space<vmem>>, %arg3: memref<1x128x32xbf16, #tpu.memory_space<vmem>>, %arg4: memref<16x32xbf16, #tpu.memory_space<vmem>>, %arg5: memref<1x32xf32, #tpu.memory_space<vmem>>, %arg6: memref<8x32xbf16, #tpu.memory_space<vmem>>, %arg7: memref<1x8x32xf32, #tpu.memory_space<vmem>>, %arg8: memref<8x1xf32, #tpu.memory_space<vmem>>, %arg9: memref<8x1xf32, #tpu.memory_space<vmem>>, %arg10: memref<8x32xf32, #tpu.memory_space<vmem>>) attributes {dimension_semantics = [#tpu.dimension_semantics<parallel>, #tpu.dimension_semantics<arbitrary>], iteration_bounds = array<i64: 2, 2>, scalar_prefetch = 0 : i64, scratch_operands = 3 : i64, tpu.core_type = #tpu.core_type<tc>, window_params = [{transform_indices = @transform_0, window_bounds = array<i64: 1, 128, 16>}, {transform_indices = @transform_1, window_bounds = array<i64: 1, 128, 32>}, {pipeline_mode = #tpu.pipeline_mode<synchronous>, transform_indices = @transform_2, window_bounds = array<i64: 16, 32>}, {pipeline_mode = #tpu.pipeline_mode<synchronous>, transform_indices = @transform_3, window_bounds = array<i64: 1, 32>}, {pipeline_mode = #tpu.pipeline_mode<synchronous>, transform_indices = @transform_4, window_bounds = array<i64: 8, 32>}, {transform_indices = @transform_5, window_bounds = array<i64: 1, 8, 32>}]} {
    %c0_i32 = arith.constant 0 : i32
    %0 = arith.cmpi eq, %arg1, %c0_i32 : i32
    %1 = arith.extui %0 : i1 to i32
    %c0_i32_0 = arith.constant 0 : i32
    %2 = arith.cmpi ne, %1, %c0_i32_0 : i32
    scf.if %2 {
      %cst_29 = arith.constant 0xFF800000 : f32
      %44 = vector.broadcast %cst_29 : f32 to vector<8x1xf32>
      %c0_30 = arith.constant 0 : index
      %c0_31 = arith.constant 0 : index
      %45 = vector.load %arg8[%c0_30, %c0_31] : memref<8x1xf32, #tpu.memory_space<vmem>>, vector<8x1xf32>
      tpu.vector_store %arg8[%c0_30, %c0_31], %44 {strides = array<i32>} : memref<8x1xf32, #tpu.memory_space<vmem>>, vector<8x1xf32>,
      %cst_32 = arith.constant 0.000000e+00 : f32
      %46 = vector.broadcast %cst_32 : f32 to vector<8x1xf32>
      %c0_33 = arith.constant 0 : index
      %c0_34 = arith.constant 0 : index
      %47 = vector.load %arg9[%c0_33, %c0_34] : memref<8x1xf32, #tpu.memory_space<vmem>>, vector<8x1xf32>
      tpu.vector_store %arg9[%c0_33, %c0_34], %46 {strides = array<i32>} : memref<8x1xf32, #tpu.memory_space<vmem>>, vector<8x1xf32>,
      %cst_35 = arith.constant 0.000000e+00 : f32
      %48 = vector.broadcast %cst_35 : f32 to vector<8x32xf32>
      %c0_36 = arith.constant 0 : index
      %c0_37 = arith.constant 0 : index
      %49 = vector.load %arg10[%c0_36, %c0_37] : memref<8x32xf32, #tpu.memory_space<vmem>>, vector<8x32xf32>
      tpu.vector_store %arg10[%c0_36, %c0_37], %48 {strides = array<i32>} : memref<8x32xf32, #tpu.memory_space<vmem>>, vector<8x32xf32>,
    } else {
    }
    %c0 = arith.constant 0 : index
    %c0_1 = arith.constant 0 : index
    %c0_2 = arith.constant 0 : index
    %3 = vector.load %arg2[%c0, %c0_1, %c0_2] : memref<1x128x16xbf16, #tpu.memory_space<vmem>>, vector<1x128x16xbf16>
    %4 = vector.shape_cast %3 : vector<1x128x16xbf16> to vector<128x16xbf16>
    %c0_3 = arith.constant 0 : index
    %c0_4 = arith.constant 0 : index
    %5 = vector.load %arg4[%c0_3, %c0_4] : memref<16x32xbf16, #tpu.memory_space<vmem>>, vector<16x32xbf16>
    %cst = arith.constant dense<0.000000e+00> : vector<128x32xf32>
    %6 = tpu.matmul %4, %5, %cst {dimension_numbers = #tpu.dot_dimension_numbers<[1], [0], [0], [1], [0, 0, 1, 1], [], []>} : vector<128x16xbf16>, vector<16x32xbf16>, vector<128x32xf32> -> vector<128x32xf32>
    %c0_5 = arith.constant 0 : index
    %c0_6 = arith.constant 0 : index
    %7 = vector.load %arg5[%c0_5, %c0_6] : memref<1x32xf32, #tpu.memory_space<vmem>>, vector<1x32xf32>
    %8 = vector.broadcast %7 : vector<1x32xf32> to vector<128x32xf32>
    %9 = arith.addf %6, %8 : vector<128x32xf32>
    %c0_7 = arith.constant 0 : index
    %c0_8 = arith.constant 0 : index
    %c0_9 = arith.constant 0 : index
    %10 = vector.load %arg3[%c0_7, %c0_8, %c0_9] : memref<1x128x32xbf16, #tpu.memory_space<vmem>>, vector<1x128x32xbf16>
    %11 = vector.shape_cast %10 : vector<1x128x32xbf16> to vector<128x32xbf16>
    %12 = arith.extf %11 : vector<128x32xbf16> to vector<128x32xf32>
    %13 = arith.addf %9, %12 : vector<128x32xf32>
    %14 = arith.truncf %13 : vector<128x32xf32> to vector<128x32xbf16>
    %c0_10 = arith.constant 0 : index
    %c0_11 = arith.constant 0 : index
    %15 = vector.load %arg6[%c0_10, %c0_11] : memref<8x32xbf16, #tpu.memory_space<vmem>>, vector<8x32xbf16>
    %cst_12 = arith.constant dense<0.000000e+00> : vector<8x128xf32>
    %16 = tpu.matmul %15, %14, %cst_12 {dimension_numbers = #tpu.dot_dimension_numbers<[1], [1], [0], [0], [0, 0, 1, 0], [], []>} : vector<8x32xbf16>, vector<128x32xbf16>, vector<8x128xf32> -> vector<8x128xf32>
    %c0_13 = arith.constant 0 : index
    %c0_14 = arith.constant 0 : index
    %17 = vector.load %arg8[%c0_13, %c0_14] : memref<8x1xf32, #tpu.memory_space<vmem>>, vector<8x1xf32>
    %cst_15 = arith.constant dense<0xFF800000> : vector<8xf32>
    %18 = vector.multi_reduction <maximumf>, %16, %cst_15 [1] : vector<8x128xf32> to vector<8xf32>
    %19 = vector.shape_cast %18 : vector<8xf32> to vector<8x1xf32>
    %20 = arith.maximumf %17, %19 : vector<8x1xf32>
    %21 = arith.subf %17, %20 : vector<8x1xf32>
    %22 = math.exp %21 : vector<8x1xf32>
    %23 = vector.broadcast %20 : vector<8x1xf32> to vector<8x128xf32>
    %24 = arith.subf %16, %23 : vector<8x128xf32>
    %25 = math.exp %24 : vector<8x128xf32>
    %c0_16 = arith.constant 0 : index
    %c0_17 = arith.constant 0 : index
    %26 = vector.load %arg9[%c0_16, %c0_17] : memref<8x1xf32, #tpu.memory_space<vmem>>, vector<8x1xf32>
    %27 = arith.mulf %22, %26 : vector<8x1xf32>
    %cst_18 = arith.constant dense<0.000000e+00> : vector<8xf32>
    %28 = vector.multi_reduction <add>, %25, %cst_18 [1] : vector<8x128xf32> to vector<8xf32>
    %29 = vector.shape_cast %28 : vector<8xf32> to vector<8x1xf32>
    %30 = arith.addf %27, %29 : vector<8x1xf32>
    %c0_19 = arith.constant 0 : index
    %c0_20 = arith.constant 0 : index
    %31 = vector.load %arg9[%c0_19, %c0_20] : memref<8x1xf32, #tpu.memory_space<vmem>>, vector<8x1xf32>
    tpu.vector_store %arg9[%c0_19, %c0_20], %30 {strides = array<i32>} : memref<8x1xf32, #tpu.memory_space<vmem>>, vector<8x1xf32>,
    %c0_21 = arith.constant 0 : index
    %c0_22 = arith.constant 0 : index
    %32 = vector.load %arg10[%c0_21, %c0_22] : memref<8x32xf32, #tpu.memory_space<vmem>>, vector<8x32xf32>
    %33 = vector.broadcast %22 : vector<8x1xf32> to vector<8x32xf32>
    %34 = arith.mulf %33, %32 : vector<8x32xf32>
    %35 = arith.truncf %25 : vector<8x128xf32> to vector<8x128xbf16>
    %36 = arith.truncf %9 : vector<128x32xf32> to vector<128x32xbf16>
    %cst_23 = arith.constant dense<0.000000e+00> : vector<8x32xf32>
    %37 = tpu.matmul %35, %36, %cst_23 {dimension_numbers = #tpu.dot_dimension_numbers<[1], [0], [0], [1], [0, 0, 1, 1], [], []>} : vector<8x128xbf16>, vector<128x32xbf16>, vector<8x32xf32> -> vector<8x32xf32>
    %38 = arith.addf %34, %37 : vector<8x32xf32>
    %c0_24 = arith.constant 0 : index
    %c0_25 = arith.constant 0 : index
    %39 = vector.load %arg10[%c0_24, %c0_25] : memref<8x32xf32, #tpu.memory_space<vmem>>, vector<8x32xf32>
    tpu.vector_store %arg10[%c0_24, %c0_25], %38 {strides = array<i32>} : memref<8x32xf32, #tpu.memory_space<vmem>>, vector<8x32xf32>,
    %c0_26 = arith.constant 0 : index
    %c0_27 = arith.constant 0 : index
    %40 = vector.load %arg8[%c0_26, %c0_27] : memref<8x1xf32, #tpu.memory_space<vmem>>, vector<8x1xf32>
    tpu.vector_store %arg8[%c0_26, %c0_27], %20 {strides = array<i32>} : memref<8x1xf32, #tpu.memory_space<vmem>>, vector<8x1xf32>,
    %c1_i32 = arith.constant 1 : i32
    %41 = arith.cmpi eq, %arg1, %c1_i32 : i32
    %42 = arith.extui %41 : i1 to i32
    %c0_i32_28 = arith.constant 0 : i32
    %43 = arith.cmpi ne, %42, %c0_i32_28 : i32
    scf.if %43 {
      %c0_29 = arith.constant 0 : index
      %c0_30 = arith.constant 0 : index
      %44 = vector.load %arg10[%c0_29, %c0_30] : memref<8x32xf32, #tpu.memory_space<vmem>>, vector<8x32xf32>
      %c0_31 = arith.constant 0 : index
      %c0_32 = arith.constant 0 : index
      %45 = vector.load %arg9[%c0_31, %c0_32] : memref<8x1xf32, #tpu.memory_space<vmem>>, vector<8x1xf32>
      %46 = tpu.reciprocal %45 {approx = true} : vector<8x1xf32> -> vector<8x1xf32>
      %47 = vector.broadcast %46 : vector<8x1xf32> to vector<8x32xf32>
      %48 = arith.mulf %44, %47 : vector<8x32xf32>
      %c0_33 = arith.constant 0 : index
      %c0_34 = arith.constant 0 : index
      %c0_35 = arith.constant 0 : index
      %49 = vector.load %arg7[%c0_33, %c0_34, %c0_35] : memref<1x8x32xf32, #tpu.memory_space<vmem>>, vector<1x8x32xf32>
      %50 = vector.shape_cast %49 : vector<1x8x32xf32> to vector<8x32xf32>
      %51 = vector.shape_cast %48 : vector<8x32xf32> to vector<1x8x32xf32>
      tpu.vector_store %arg7[%c0_33, %c0_34, %c0_35], %51 {strides = array<i32>} : memref<1x8x32xf32, #tpu.memory_space<vmem>>, vector<1x8x32xf32>,
    } else {
    }
    return
  }
  func.func @transform_0(%arg0: i32, %arg1: i32) -> (i32, i32, i32) {
    %c0_i32 = arith.constant 0 : i32
    %c0_i32_0 = arith.constant 0 : i32
    return %arg0, %arg1, %c0_i32 : i32, i32, i32
  }
  func.func @transform_1(%arg0: i32, %arg1: i32) -> (i32, i32, i32) {
    %c0_i32 = arith.constant 0 : i32
    %c0_i32_0 = arith.constant 0 : i32
    return %arg0, %arg1, %c0_i32 : i32, i32, i32
  }
  func.func @transform_2(%arg0: i32, %arg1: i32) -> (i32, i32) {
    %c0_i32 = arith.constant 0 : i32
    %c0_i32_0 = arith.constant 0 : i32
    %c0_i32_1 = arith.constant 0 : i32
    return %c0_i32, %c0_i32_0 : i32, i32
  }
  func.func @transform_3(%arg0: i32, %arg1: i32) -> (i32, i32) {
    %c0_i32 = arith.constant 0 : i32
    %c0_i32_0 = arith.constant 0 : i32
    %c0_i32_1 = arith.constant 0 : i32
    return %c0_i32, %c0_i32_0 : i32, i32
  }
  func.func @transform_4(%arg0: i32, %arg1: i32) -> (i32, i32) {
    %c0_i32 = arith.constant 0 : i32
    %c0_i32_0 = arith.constant 0 : i32
    %c0_i32_1 = arith.constant 0 : i32
    return %c0_i32, %c0_i32_0 : i32, i32
  }
  func.func @transform_5(%arg0: i32, %arg1: i32) -> (i32, i32, i32) {
    %c0_i32 = arith.constant 0 : i32
    %c0_i32_0 = arith.constant 0 : i32
    %c0_i32_1 = arith.constant 0 : i32
    return %arg0, %c0_i32, %c0_i32_0 : i32, i32, i32
  }
}

module attributes {stable_mosaic.version = 11 : i64} {
  func.func @_vib_head_kernel(%arg0: i32, %arg1: memref<2x8x32xf32, #tpu.memory_space<vmem>>, %arg2: memref<2x8x128xf32, #tpu.memory_space<vmem>>, %arg3: memref<32x32xbf16, #tpu.memory_space<vmem>>, %arg4: memref<1x32xf32, #tpu.memory_space<vmem>>, %arg5: memref<32x128xbf16, #tpu.memory_space<vmem>>, %arg6: memref<1x128xf32, #tpu.memory_space<vmem>>, %arg7: memref<32x128xbf16, #tpu.memory_space<vmem>>, %arg8: memref<1x128xf32, #tpu.memory_space<vmem>>, %arg9: memref<8x128xf32, #tpu.memory_space<vmem>>, %arg10: memref<1x8xf32, #tpu.memory_space<vmem>>, %arg11: memref<2x8xf32, #tpu.memory_space<vmem>>, %arg12: memref<2x8x128xf32, #tpu.memory_space<vmem>>, %arg13: memref<2x8x128xf32, #tpu.memory_space<vmem>>) attributes {dimension_semantics = [#tpu.dimension_semantics<arbitrary>], iteration_bounds = array<i64: 1>, scalar_prefetch = 0 : i64, scratch_operands = 0 : i64, tpu.core_type = #tpu.core_type<tc>, window_params = [{pipeline_mode = #tpu.pipeline_mode<synchronous>, transform_indices = @transform_0, window_bounds = array<i64: 2, 8, 32>}, {pipeline_mode = #tpu.pipeline_mode<synchronous>, transform_indices = @transform_1, window_bounds = array<i64: 2, 8, 128>}, {pipeline_mode = #tpu.pipeline_mode<synchronous>, transform_indices = @transform_2, window_bounds = array<i64: 32, 32>}, {pipeline_mode = #tpu.pipeline_mode<synchronous>, transform_indices = @transform_3, window_bounds = array<i64: 1, 32>}, {pipeline_mode = #tpu.pipeline_mode<synchronous>, transform_indices = @transform_4, window_bounds = array<i64: 32, 128>}, {pipeline_mode = #tpu.pipeline_mode<synchronous>, transform_indices = @transform_5, window_bounds = array<i64: 1, 128>}, {pipeline_mode = #tpu.pipeline_mode<synchronous>, transform_indices = @transform_6, window_bounds = array<i64: 32, 128>}, {pipeline_mode = #tpu.pipeline_mode<synchronous>, transform_indices = @transform_7, window_bounds = array<i64: 1, 128>}, {pipeline_mode = #tpu.pipeline_mode<synchronous>, transform_indices = @transform_8, window_bounds = array<i64: 8, 128>}, {pipeline_mode = #tpu.pipeline_mode<synchronous>, transform_indices = @transform_9, window_bounds = array<i64: 1, 8>}, {pipeline_mode = #tpu.pipeline_mode<synchronous>, transform_indices = @transform_10, window_bounds = array<i64: 2, 8>}, {pipeline_mode = #tpu.pipeline_mode<synchronous>, transform_indices = @transform_11, window_bounds = array<i64: 2, 8, 128>}, {pipeline_mode = #tpu.pipeline_mode<synchronous>, transform_indices = @transform_12, window_bounds = array<i64: 2, 8, 128>}]} {
    %c0 = arith.constant 0 : index
    %c0_0 = arith.constant 0 : index
    %c0_1 = arith.constant 0 : index
    %0 = vector.load %arg1[%c0, %c0_0, %c0_1] : memref<2x8x32xf32, #tpu.memory_space<vmem>>, vector<2x8x32xf32>
    %1 = vector.shape_cast %0 : vector<2x8x32xf32> to vector<16x32xf32>
    %2 = arith.truncf %1 : vector<16x32xf32> to vector<16x32xbf16>
    %c0_2 = arith.constant 0 : index
    %c0_3 = arith.constant 0 : index
    %3 = vector.load %arg3[%c0_2, %c0_3] : memref<32x32xbf16, #tpu.memory_space<vmem>>, vector<32x32xbf16>
    %cst = arith.constant dense<0.000000e+00> : vector<16x32xf32>
    %4 = tpu.matmul %2, %3, %cst {dimension_numbers = #tpu.dot_dimension_numbers<[1], [0], [0], [1], [0, 0, 1, 1], [], []>} : vector<16x32xbf16>, vector<32x32xbf16>, vector<16x32xf32> -> vector<16x32xf32>
    %c0_4 = arith.constant 0 : index
    %c0_5 = arith.constant 0 : index
    %5 = vector.load %arg4[%c0_4, %c0_5] : memref<1x32xf32, #tpu.memory_space<vmem>>, vector<1x32xf32>
    %6 = vector.broadcast %5 : vector<1x32xf32> to vector<16x32xf32>
    %7 = arith.addf %4, %6 : vector<16x32xf32>
    %cst_6 = arith.constant 0.000000e+00 : f32
    %8 = vector.broadcast %cst_6 : f32 to vector<16x32xf32>
    %9 = arith.maximumf %7, %8 : vector<16x32xf32>
    %10 = arith.truncf %9 : vector<16x32xf32> to vector<16x32xbf16>
    %c0_7 = arith.constant 0 : index
    %c0_8 = arith.constant 0 : index
    %11 = vector.load %arg5[%c0_7, %c0_8] : memref<32x128xbf16, #tpu.memory_space<vmem>>, vector<32x128xbf16>
    %cst_9 = arith.constant dense<0.000000e+00> : vector<16x128xf32>
    %12 = tpu.matmul %10, %11, %cst_9 {dimension_numbers = #tpu.dot_dimension_numbers<[1], [0], [0], [1], [0, 0, 1, 1], [], []>} : vector<16x32xbf16>, vector<32x128xbf16>, vector<16x128xf32> -> vector<16x128xf32>
    %c0_10 = arith.constant 0 : index
    %c0_11 = arith.constant 0 : index
    %13 = vector.load %arg6[%c0_10, %c0_11] : memref<1x128xf32, #tpu.memory_space<vmem>>, vector<1x128xf32>
    %14 = vector.broadcast %13 : vector<1x128xf32> to vector<16x128xf32>
    %15 = arith.addf %12, %14 : vector<16x128xf32>
    %c0_12 = arith.constant 0 : index
    %c0_13 = arith.constant 0 : index
    %16 = vector.load %arg7[%c0_12, %c0_13] : memref<32x128xbf16, #tpu.memory_space<vmem>>, vector<32x128xbf16>
    %cst_14 = arith.constant dense<0.000000e+00> : vector<16x128xf32>
    %17 = tpu.matmul %10, %16, %cst_14 {dimension_numbers = #tpu.dot_dimension_numbers<[1], [0], [0], [1], [0, 0, 1, 1], [], []>} : vector<16x32xbf16>, vector<32x128xbf16>, vector<16x128xf32> -> vector<16x128xf32>
    %c0_15 = arith.constant 0 : index
    %c0_16 = arith.constant 0 : index
    %18 = vector.load %arg8[%c0_15, %c0_16] : memref<1x128xf32, #tpu.memory_space<vmem>>, vector<1x128xf32>
    %19 = vector.broadcast %18 : vector<1x128xf32> to vector<16x128xf32>
    %20 = arith.addf %17, %19 : vector<16x128xf32>
    %cst_17 = arith.constant 0.000000e+00 : f32
    %21 = vector.broadcast %cst_17 : f32 to vector<16x128xf32>
    %22 = arith.maximumf %20, %21 : vector<16x128xf32>
    %23 = math.absf %20 : vector<16x128xf32>
    %cst_18 = arith.constant 0.000000e+00 : f32
    %24 = vector.broadcast %cst_18 : f32 to vector<16x128xf32>
    %25 = arith.subf %24, %23 : vector<16x128xf32>
    %26 = math.exp %25 : vector<16x128xf32>
    %cst_19 = arith.constant 1.000000e+00 : f32
    %27 = vector.broadcast %cst_19 : f32 to vector<16x128xf32>
    %28 = arith.addf %27, %26 : vector<16x128xf32>
    %29 = math.log %28 : vector<16x128xf32>
    %30 = arith.addf %22, %29 : vector<16x128xf32>
    %c0_20 = arith.constant 0 : index
    %c0_21 = arith.constant 0 : index
    %c0_22 = arith.constant 0 : index
    %31 = vector.load %arg2[%c0_20, %c0_21, %c0_22] : memref<2x8x128xf32, #tpu.memory_space<vmem>>, vector<2x8x128xf32>
    %32 = vector.shape_cast %31 : vector<2x8x128xf32> to vector<16x128xf32>
    %33 = arith.mulf %30, %32 : vector<16x128xf32>
    %34 = arith.addf %15, %33 : vector<16x128xf32>
    %35 = vector.shape_cast %15 : vector<16x128xf32> to vector<2x8x128xf32>
    %c0_23 = arith.constant 0 : index
    %c0_24 = arith.constant 0 : index
    %c0_25 = arith.constant 0 : index
    %36 = vector.load %arg12[%c0_23, %c0_24, %c0_25] : memref<2x8x128xf32, #tpu.memory_space<vmem>>, vector<2x8x128xf32>
    tpu.vector_store %arg12[%c0_23, %c0_24, %c0_25], %35 {strides = array<i32>} : memref<2x8x128xf32, #tpu.memory_space<vmem>>, vector<2x8x128xf32>,
    %37 = vector.shape_cast %30 : vector<16x128xf32> to vector<2x8x128xf32>
    %c0_26 = arith.constant 0 : index
    %c0_27 = arith.constant 0 : index
    %c0_28 = arith.constant 0 : index
    %38 = vector.load %arg13[%c0_26, %c0_27, %c0_28] : memref<2x8x128xf32, #tpu.memory_space<vmem>>, vector<2x8x128xf32>
    tpu.vector_store %arg13[%c0_26, %c0_27, %c0_28], %37 {strides = array<i32>} : memref<2x8x128xf32, #tpu.memory_space<vmem>>, vector<2x8x128xf32>,
    %39 = vector.shape_cast %34 : vector<16x128xf32> to vector<2x8x128xf32>
    %c0_29 = arith.constant 0 : index
    %c0_30 = arith.constant 0 : index
    %40 = vector.load %arg9[%c0_29, %c0_30] : memref<8x128xf32, #tpu.memory_space<vmem>>, vector<8x128xf32>
    %41 = vector.shape_cast %40 : vector<8x128xf32> to vector<1x8x128xf32>
    %42 = vector.broadcast %41 : vector<1x8x128xf32> to vector<2x8x128xf32>
    %43 = arith.mulf %42, %39 : vector<2x8x128xf32>
    %cst_31 = arith.constant dense<0.000000e+00> : vector<2x8xf32>
    %44 = vector.multi_reduction <add>, %43, %cst_31 [2] : vector<2x8x128xf32> to vector<2x8xf32>
    %c0_32 = arith.constant 0 : index
    %c0_33 = arith.constant 0 : index
    %45 = vector.load %arg10[%c0_32, %c0_33] : memref<1x8xf32, #tpu.memory_space<vmem>>, vector<1x8xf32>
    %46 = vector.broadcast %45 : vector<1x8xf32> to vector<2x8xf32>
    %47 = arith.addf %44, %46 : vector<2x8xf32>
    %c0_34 = arith.constant 0 : index
    %c0_35 = arith.constant 0 : index
    %48 = vector.load %arg11[%c0_34, %c0_35] : memref<2x8xf32, #tpu.memory_space<vmem>>, vector<2x8xf32>
    tpu.vector_store %arg11[%c0_34, %c0_35], %47 {strides = array<i32>} : memref<2x8xf32, #tpu.memory_space<vmem>>, vector<2x8xf32>,
    return
  }
  func.func @transform_0(%arg0: i32) -> (i32, i32, i32) {
    %c0_i32 = arith.constant 0 : i32
    %c0_i32_0 = arith.constant 0 : i32
    %c0_i32_1 = arith.constant 0 : i32
    %c0_i32_2 = arith.constant 0 : i32
    return %c0_i32, %c0_i32_0, %c0_i32_1 : i32, i32, i32
  }
  func.func @transform_1(%arg0: i32) -> (i32, i32, i32) {
    %c0_i32 = arith.constant 0 : i32
    %c0_i32_0 = arith.constant 0 : i32
    %c0_i32_1 = arith.constant 0 : i32
    %c0_i32_2 = arith.constant 0 : i32
    return %c0_i32, %c0_i32_0, %c0_i32_1 : i32, i32, i32
  }
  func.func @transform_2(%arg0: i32) -> (i32, i32) {
    %c0_i32 = arith.constant 0 : i32
    %c0_i32_0 = arith.constant 0 : i32
    %c0_i32_1 = arith.constant 0 : i32
    return %c0_i32, %c0_i32_0 : i32, i32
  }
  func.func @transform_3(%arg0: i32) -> (i32, i32) {
    %c0_i32 = arith.constant 0 : i32
    %c0_i32_0 = arith.constant 0 : i32
    %c0_i32_1 = arith.constant 0 : i32
    return %c0_i32, %c0_i32_0 : i32, i32
  }
  func.func @transform_4(%arg0: i32) -> (i32, i32) {
    %c0_i32 = arith.constant 0 : i32
    %c0_i32_0 = arith.constant 0 : i32
    %c0_i32_1 = arith.constant 0 : i32
    return %c0_i32, %c0_i32_0 : i32, i32
  }
  func.func @transform_5(%arg0: i32) -> (i32, i32) {
    %c0_i32 = arith.constant 0 : i32
    %c0_i32_0 = arith.constant 0 : i32
    %c0_i32_1 = arith.constant 0 : i32
    return %c0_i32, %c0_i32_0 : i32, i32
  }
  func.func @transform_6(%arg0: i32) -> (i32, i32) {
    %c0_i32 = arith.constant 0 : i32
    %c0_i32_0 = arith.constant 0 : i32
    %c0_i32_1 = arith.constant 0 : i32
    return %c0_i32, %c0_i32_0 : i32, i32
  }
  func.func @transform_7(%arg0: i32) -> (i32, i32) {
    %c0_i32 = arith.constant 0 : i32
    %c0_i32_0 = arith.constant 0 : i32
    %c0_i32_1 = arith.constant 0 : i32
    return %c0_i32, %c0_i32_0 : i32, i32
  }
  func.func @transform_8(%arg0: i32) -> (i32, i32) {
    %c0_i32 = arith.constant 0 : i32
    %c0_i32_0 = arith.constant 0 : i32
    %c0_i32_1 = arith.constant 0 : i32
    return %c0_i32, %c0_i32_0 : i32, i32
  }
  func.func @transform_9(%arg0: i32) -> (i32, i32) {
    %c0_i32 = arith.constant 0 : i32
    %c0_i32_0 = arith.constant 0 : i32
    %c0_i32_1 = arith.constant 0 : i32
    return %c0_i32, %c0_i32_0 : i32, i32
  }
  func.func @transform_10(%arg0: i32) -> (i32, i32) {
    %c0_i32 = arith.constant 0 : i32
    %c0_i32_0 = arith.constant 0 : i32
    %c0_i32_1 = arith.constant 0 : i32
    return %c0_i32, %c0_i32_0 : i32, i32
  }
  func.func @transform_11(%arg0: i32) -> (i32, i32, i32) {
    %c0_i32 = arith.constant 0 : i32
    %c0_i32_0 = arith.constant 0 : i32
    %c0_i32_1 = arith.constant 0 : i32
    %c0_i32_2 = arith.constant 0 : i32
    return %c0_i32, %c0_i32_0, %c0_i32_1 : i32, i32, i32
  }
  func.func @transform_12(%arg0: i32) -> (i32, i32, i32) {
    %c0_i32 = arith.constant 0 : i32
    %c0_i32_0 = arith.constant 0 : i32
    %c0_i32_1 = arith.constant 0 : i32
    %c0_i32_2 = arith.constant 0 : i32
    return %c0_i32, %c0_i32_0, %c0_i32_1 : i32, i32, i32
  }
}

</mosaic_0001>

<llo_original>
// kernel: lemodel_vib_forward.2
$region0: #{lemodel_vib_forward.2}
  #allocation0 [shape = 'u32[]', space=smem, size = 0x4, offset = 0x4, fixed_abs, tag = 'smem constant byte address 0x4 - core index']
  #allocation1 [shape = 'u32[144,128]{1,0:T(1,128)}', space=vmem, size = 0x12000, scoped, tag = 'internal scratch']
  #allocation2 [shape = 'f32[8,1]{1,0:T(8,128)}', space=vmem, size = 0x1000, scoped, tag = 'scratch operand']
  #allocation3 [shape = 'f32[8,1]{1,0:T(8,128)}', space=vmem, size = 0x1000, scoped, tag = 'scratch operand']
  #allocation4 [shape = 'f32[8,32]{1,0:T(8,128)}', space=vmem, size = 0x1000, scoped, tag = 'scratch operand']
  %s0 = inlined_call_operand.vmem [shape: bf16[2,256,16], index: 0, kind: input, shape index: {}]
  %s1 = inlined_call_operand.vmem [shape: bf16[2,256,32], index: 1, kind: input, shape index: {}]
  %s2 = inlined_call_operand.vmem [shape: bf16[16,32], index: 2, kind: input, shape index: {}]
  %s3 = inlined_call_operand.vmem [shape: f32[1,32], index: 3, kind: input, shape index: {}]
  %s4 = inlined_call_operand.vmem [shape: bf16[8,32], index: 4, kind: input, shape index: {}]
  %s5 = inlined_call_operand.vmem [shape: f32[2,8,32], index: 5, kind: output, shape index: {}]
  %s6 = sld [smem:[#allocation0]]
  $region61: #{lemodel_vib_forward.2} parent=0
    _
  %s8 = ssub.s32 1, %s6
  %s9 = scalar_select 0, %s8, %s6
  loop: start=0, step=1, limit=6
  $region2: #{lemodel_vib_forward.2} parent=0 // loop_pre_header
    _
  $region3: #{lemodel_vib_forward.2} parent=0 // loop_header
    %s11 = sphi 0, %s15
    %p12 = scmp.ge.s32.totalorder %s11, 6
    %s18 = sphi 0, %s30
    %s19 = sphi 0, %s26
    %s20 = sphi 0, %s18
    %s21 = sphi 0, %s19
    %s22 = sphi 0, %s20
    %s23 = sphi 0, %s21
    %s35 = sphi 0, %s37
    %s38 = sphi 0, %s35
    %s39 = sphi 0, %s38
    %s55 = sphi 0, %s39
    %s63 = sphi 0, %s65
    %s66 = sphi 0, %s63
    %s67 = sphi 0, %s66
    %s83 = sphi 0, %s67
    %s87 = sphi 0, %s87
    %s89 = sphi 0, %s87
    %s90 = sphi 0, %s89
    %s104 = sphi 0, %s90
    %s108 = sphi 0, %s108
    %s110 = sphi 0, %s108
    %s111 = sphi 0, %s110
    %s125 = sphi 0, %s111
    %s129 = sphi 0, %s129
    %s131 = sphi 0, %s129
    %s132 = sphi 0, %s131
    %s146 = sphi 0, %s132
    %s152 = sphi 0, %s154
    %s155 = sphi 0, %s152
    %s156 = sphi 0, %s155
    %s172 = sphi 0, %s156
  $region4: #{lemodel_vib_forward.2} parent=0 // loop_header_branch
    %14 = sbr.rel (%p12) target = $region8
  $region5: #{lemodel_vib_forward.2} parent=0 // loop_body
    %s16 = ssub.s32 %s11, 1
    %s17 = ssub.s32 %s11, 2
    %s24 = sadd.s32 1, %s19
    %p25 = scmp.ge.s32.totalorder %s24, 2
    %s26 = scalar_select %p25, 0, %s24
    %s27 = sadd.s32 1, %s18
    %s28 = scalar_select %p25, %s27, %s18
    %p29 = scmp.ge.s32.totalorder %s28, 2
    %s30 = scalar_select %p29, 0, %s28
    %s31 = ssub.s32 %s18, %s30
    %s32 = ssub.s32 %s19, %s26
    %s33 = sor.u32 %s31, %s32
    %p34 = scmp.eq.s32.totalorder %s33, 0
    %s36 = sadd.s32 %s35, 1
    %s37 = scalar_select %p34, %s35, %s36
    %p40 = pneg %p34
    %p41 = scmp.eq.s32.totalorder %s11, 3
    %p42 = por %p40, %p41
    %p43 = scmp.ne.s32.totalorder %s35, %s38
    %p44 = scmp.eq.s32.totalorder %s11, 0
    %p45 = por %p43, %p44
    %p46 = scmp.ne.s32.totalorder %s35, %s38
    %p47 = scmp.eq.s32.totalorder %s16, 3
    %p48 = por %p46, %p47
    %p49 = scmp.ne.s32.totalorder %s38, %s39
    %p50 = scmp.eq.s32.totalorder %s16, 0
    %p51 = por %p49, %p50
    %p52 = scmp.ne.s32.totalorder %s38, %s39
    %p53 = scmp.eq.s32.totalorder %s17, 3
    %p54 = por %p52, %p53
    %p56 = scmp.ne.s32.totalorder %s39, %s55
    %p57 = scmp.eq.s32.totalorder %s17, 0
    %p58 = por %p56, %p57
    %s59 = ssub.s32 %s18, %s30
    %s60 = ssub.s32 %s19, %s26
    %s61 = sor.u32 %s59, %s60
    %p62 = scmp.eq.s32.totalorder %s61, 0
    %s64 = sadd.s32 %s63, 1
    %s65 = scalar_select %p62, %s63, %s64
    %p68 = pneg %p62
    %p69 = scmp.eq.s32.totalorder %s11, 3
    %p70 = por %p68, %p69
    %p71 = scmp.ne.s32.totalorder %s63, %s66
    %p72 = scmp.eq.s32.totalorder %s11, 0
    %p73 = por %p71, %p72
    %p74 = scmp.ne.s32.totalorder %s63, %s66
    %p75 = scmp.eq.s32.totalorder %s16, 3
    %p76 = por %p74, %p75
    %p77 = scmp.ne.s32.totalorder %s66, %s67
    %p78 = scmp.eq.s32.totalorder %s16, 0
    %p79 = por %p77, %p78
    %p80 = scmp.ne.s32.totalorder %s66, %s67
    %p81 = scmp.eq.s32.totalorder %s17, 3
    %p82 = por %p80, %p81
    %p84 = scmp.ne.s32.totalorder %s67, %s83
    %p85 = scmp.eq.s32.totalorder %s17, 0
    %p86 = por %p84, %p85
    %s88 = sadd.s32 %s87, 1
    %p91 = scmp.eq.s32.totalorder %s11, 3
    %p92 = scmp.ne.s32.totalorder %s87, %s89
    %p93 = scmp.eq.s32.totalorder %s11, 0
    %p94 = por %p92, %p93
    %p95 = scmp.ne.s32.totalorder %s87, %s89
    %p96 = scmp.eq.s32.totalorder %s16, 3
    %p97 = por %p95, %p96
    %p98 = scmp.ne.s32.totalorder %s89, %s90
    %p99 = scmp.eq.s32.totalorder %s16, 0
    %p100 = por %p98, %p99
    %p101 = scmp.ne.s32.totalorder %s89, %s90
    %p102 = scmp.eq.s32.totalorder %s17, 3
    %p103 = por %p101, %p102
    %p105 = scmp.ne.s32.totalorder %s90, %s104
    %p106 = scmp.eq.s32.totalorder %s17, 0
    %p107 = por %p105, %p106
    %s109 = sadd.s32 %s108, 1
    %p112 = scmp.eq.s32.totalorder %s11, 3
    %p113 = scmp.ne.s32.totalorder %s108, %s110
    %p114 = scmp.eq.s32.totalorder %s11, 0
    %p115 = por %p113, %p114
    %p116 = scmp.ne.s32.totalorder %s108, %s110
    %p117 = scmp.eq.s32.totalorder %s16, 3
    %p118 = por %p116, %p117
    %p119 = scmp.ne.s32.totalorder %s110, %s111
    %p120 = scmp.eq.s32.totalorder %s16, 0
    %p121 = por %p119, %p120
    %p122 = scmp.ne.s32.totalorder %s110, %s111
    %p123 = scmp.eq.s32.totalorder %s17, 3
    %p124 = por %p122, %p123
    %p126 = scmp.ne.s32.totalorder %s111, %s125
    %p127 = scmp.eq.s32.totalorder %s17, 0
    %p128 = por %p126, %p127
    %s130 = sadd.s32 %s129, 1
    %p133 = scmp.eq.s32.totalorder %s11, 3
    %p134 = scmp.ne.s32.totalorder %s129, %s131
    %p135 = scmp.eq.s32.totalorder %s11, 0
    %p136 = por %p134, %p135
    %p137 = scmp.ne.s32.totalorder %s129, %s131
    %p138 = scmp.eq.s32.totalorder %s16, 3
    %p139 = por %p137, %p138
    %p140 = scmp.ne.s32.totalorder %s131, %s132
    %p141 = scmp.eq.s32.totalorder %s16, 0
    %p142 = por %p140, %p141
    %p143 = scmp.ne.s32.totalorder %s131, %s132
    %p144 = scmp.eq.s32.totalorder %s17, 3
    %p145 = por %p143, %p144
    %p147 = scmp.ne.s32.totalorder %s132, %s146
    %p148 = scmp.eq.s32.totalorder %s17, 0
    %p149 = por %p147, %p148
    %s150 = ssub.s32 %s18, %s30
    %p151 = scmp.eq.s32.totalorder %s150, 0
    %s153 = sadd.s32 %s152, 1
    %s154 = scalar_select %p151, %s152, %s153
    %p157 = pneg %p151
    %p158 = scmp.eq.s32.totalorder %s11, 3
    %p159 = por %p157, %p158
    %p160 = scmp.ne.s32.totalorder %s152, %s155
    %p161 = scmp.eq.s32.totalorder %s11, 0
    %p162 = por %p160, %p161
    %p163 = scmp.ne.s32.totalorder %s152, %s155
    %p164 = scmp.eq.s32.totalorder %s16, 3
    %p165 = por %p163, %p164
    %p166 = scmp.ne.s32.totalorder %s155, %s156
    %p167 = scmp.eq.s32.totalorder %s16, 0
    %p168 = por %p166, %p167
    %p169 = scmp.ne.s32.totalorder %s155, %s156
    %p170 = scmp.eq.s32.totalorder %s17, 3
    %p171 = por %p169, %p170
    %p173 = scmp.ne.s32.totalorder %s156, %s172
    %p174 = scmp.eq.s32.totalorder %s17, 0
    %p175 = por %p173, %p174
    %p176 = scmp.le.s32.totalorder 1, %s11
    %p177 = scmp.lt.s32.totalorder %s11, 5
    %p178 = pnand %p176, %p177
    %p179 = pneg %p178
    // Predicated region
    $region9: #{lemodel_vib_forward.2} parent=5 // pred_check
      _
    $region10: #{lemodel_vib_forward.2} parent=5 // pred_check_branch
      %181 = sbr.rel (%p178) target = $region12
    $region11: #{lemodel_vib_forward.2} parent=5 // pred_region
      %s182 = ssub.s32 %s11, 1
      // Predicated region
      $region13: #{lemodel_vib_forward.2} parent=11 // pred_check
        %p183 = pneg %p100
      $region14: #{lemodel_vib_forward.2} parent=11 // pred_check_branch
        %185 = sbr.rel (%p183) target = $region16
      $region15: #{lemodel_vib_forward.2} parent=11 // pred_region
        _
      $region16: #{lemodel_vib_forward.2} parent=11 // pred_fallthru
        _
      // Predicated region
      $region17: #{lemodel_vib_forward.2} parent=11 // pred_check
        %p186 = pneg %p121
      $region18: #{lemodel_vib_forward.2} parent=11 // pred_check_branch
        %188 = sbr.rel (%p186) target = $region20
      $region19: #{lemodel_vib_forward.2} parent=11 // pred_region
        _
      $region20: #{lemodel_vib_forward.2} parent=11 // pred_fallthru
        _
      // Predicated region
      $region21: #{lemodel_vib_forward.2} parent=11 // pred_check
        %p189 = pneg %p142
      $region22: #{lemodel_vib_forward.2} parent=11 // pred_check_branch
        %191 = sbr.rel (%p189) target = $region24
      $region23: #{lemodel_vib_forward.2} parent=11 // pred_region
        _
      $region24: #{lemodel_vib_forward.2} parent=11 // pred_fallthru
        _
    $region12: #{lemodel_vib_forward.2} parent=5 // pred_fallthru
      _
    %p192 = scmp.lt.s32.totalorder %s11, 4
    // Predicated region
    $region25: #{lemodel_vib_forward.2} parent=5 // pred_check
      %p193 = pneg %p192
    $region26: #{lemodel_vib_forward.2} parent=5 // pred_check_branch
      %195 = sbr.rel (%p193) target = $region28
    $region27: #{lemodel_vib_forward.2} parent=5 // pred_region
      // Predicated region
      $region29: #{lemodel_vib_forward.2} parent=27 // pred_check
        %p196 = pneg %p45
      $region30: #{lemodel_vib_forward.2} parent=27 // pred_check_branch
        %198 = sbr.rel (%p196) target = $region32
      $region31: #{lemodel_vib_forward.2} parent=27 // pred_region
        %s199 = smul.u32 16, %s19
        %p200 = scmp.lt.s32.totalorder %s18, 1
        %s201 = scalar_select %p200, %s18, 1
        %p202 = scmp.lt.s32.totalorder %s199, 31
        %s203 = scalar_select %p202, %s199, 31
        %s204 = smul.addr %s201, 32
        %s205 = sadd.s32 %s203, %s204
        %s206 = smul.addr %s205, 4
        %s207 = scalar_lea.vmem %s0, %s206
        %s208 = smul.u32 16, %s19
      $region32: #{lemodel_vib_forward.2} parent=27 // pred_fallthru
        _
      // Predicated region
      $region33: #{lemodel_vib_forward.2} parent=27 // pred_check
        %p209 = pneg %p73
      $region34: #{lemodel_vib_forward.2} parent=27 // pred_check_branch
        %211 = sbr.rel (%p209) target = $region36
      $region35: #{lemodel_vib_forward.2} parent=27 // pred_region
        %s212 = smul.u32 16, %s19
        %p213 = scmp.lt.s32.totalorder %s18, 1
        %s214 = scalar_select %p213, %s18, 1
        %p215 = scmp.lt.s32.totalorder %s212, 31
        %s216 = scalar_select %p215, %s212, 31
        %s217 = smul.addr %s214, 32
        %s218 = sadd.s32 %s216, %s217
        %s219 = smul.addr %s218, 4
        %s220 = scalar_lea.vmem %s1, %s219
        %s221 = smul.u32 16, %s19
      $region36: #{lemodel_vib_forward.2} parent=27 // pred_fallthru
        _
    $region28: #{lemodel_vib_forward.2} parent=5 // pred_fallthru
      _
    %p222 = scmp.le.s32.totalorder 1, %s11
    %p223 = scmp.lt.s32.totalorder %s11, 5
    %p224 = pnand %p222, %p223
    %p225 = pneg %p224
    // Predicated region
    $region37: #{lemodel_vib_forward.2} parent=5 // pred_check
      _
    $region38: #{lemodel_vib_forward.2} parent=5 // pred_check_branch
      %227 = sbr.rel (%p224) target = $region40
    $region39: #{lemodel_vib_forward.2} parent=5 // pred_region
      %s228 = ssub.s32 %s11, 1
      %s229 = smul.u32 16, %s21
      %p230 = scmp.lt.s32.totalorder %s20, 1
      %s231 = scalar_select %p230, %s20, 1
      %p232 = scmp.lt.s32.totalorder %s229, 31
      %s233 = scalar_select %p232, %s229, 31
      %s234 = smul.addr %s231, 32
      %s235 = sadd.s32 %s233, %s234
      %s236 = smul.addr %s235, 4
      %s237 = scalar_lea.vmem %s0, %s236
      %p238 = pneg %p51
      %p239 = pneg %p48
      %s240 = smul.u32 16, %s21
      %p241 = scmp.lt.s32.totalorder %s20, 1
      %s242 = scalar_select %p241, %s20, 1
      %p243 = scmp.lt.s32.totalorder %s240, 31
      %s244 = scalar_select %p243, %s240, 31
      %s245 = smul.addr %s242, 32
      %s246 = sadd.s32 %s244, %s245
      %s247 = smul.addr %s246, 4
      %s248 = scalar_lea.vmem %s1, %s247
      %p249 = pneg %p79
      %p250 = pneg %p76
      %p251 = pneg %p100
      %p252 = pneg %p97
      %p253 = pneg %p121
      %p254 = pneg %p118
      %p255 = pneg %p142
      %p256 = pneg %p139
      %p257 = pneg %p168
      %p258 = pneg %p165
      %p259 = scmp.lt.s32.totalorder %s20, 1
      %s260 = scalar_select %p259, %s20, 1
      %s261 = smul.addr %s260, 8
      %s262 = scalar_lea.vmem %s5, %s261
      %s263 = smul.u32 16, %s21
      %p264 = scmp.lt.s32.totalorder %s20, 1
      %s265 = scalar_select %p264, %s20, 1
      %p266 = scmp.lt.s32.totalorder %s263, 31
      %s267 = scalar_select %p266, %s263, 31
      %s268 = smul.addr %s265, 32
      %s269 = sadd.s32 %s267, %s268
      %s270 = smul.addr %s269, 4
      %s271 = scalar_lea.vmem %s0, %s270
      %s272 = smul.u32 16, %s21
      %s273 = smul.u32 16, %s21
      %p274 = scmp.lt.s32.totalorder %s20, 1
      %s275 = scalar_select %p274, %s20, 1
      %p276 = scmp.lt.s32.totalorder %s273, 31
      %s277 = scalar_select %p276, %s273, 31
      %s278 = smul.addr %s275, 32
      %s279 = sadd.s32 %s277, %s278
      %s280 = smul.addr %s279, 4
      %s281 = scalar_lea.vmem %s1, %s280
      %s282 = smul.u32 16, %s21
      %p283 = scmp.lt.s32.totalorder %s20, 1
      %s284 = scalar_select %p283, %s20, 1
      %s285 = smul.addr %s284, 8
      %s286 = scalar_lea.vmem %s5, %s285
      %p288 = scmp.eq.s32.totalorder %s21, 0
      // Predicated region
      $region41: #{lemodel_vib_forward.2} parent=39 // pred_check
        %p289 = pneg %p288
      $region42: #{lemodel_vib_forward.2} parent=39 // pred_check_branch
        %291 = sbr.rel (%p289) target = $region44
      $region43: #{lemodel_vib_forward.2} parent=39 // pred_region
        %vm292 = vcmask 7168
        %293 = vst.msk [vmem:[#allocation2] sm:$0xff] %vm292, -inf
        %294 = vst.msk [vmem:[#allocation3] sm:$0xff] %vm292, 0.0
        %vm295 = vcmask 261120
        %296 = vst.msk [vmem:[#allocation4] sm:$0xff] %vm295, 0.0
      $region44: #{lemodel_vib_forward.2} parent=39 // pred_fallthru
        _
      %v297 = vld [vmem:[%s271] sm:$0xf]
      %v298 = vld [vmem:[%s271 + $0x4] sm:$0xf]
      %v299 = vld [vmem:[%s271 + $0x8] sm:$0xf]
      %v300 = vld [vmem:[%s271 + $0xc] sm:$0xf]
      %v301 = vld [vmem:[%s271 + $0x10] sm:$0xf]
      %v302 = vld [vmem:[%s271 + $0x14] sm:$0xf]
      %v303 = vld [vmem:[%s271 + $0x18] sm:$0xf]
      %v304 = vld [vmem:[%s271 + $0x1c] sm:$0xf]
      %v305 = vld [vmem:[%s271 + $0x20] sm:$0xf]
      %v306 = vld [vmem:[%s271 + $0x24] sm:$0xf]
      %v307 = vld [vmem:[%s271 + $0x28] sm:$0xf]
      %v308 = vld [vmem:[%s271 + $0x2c] sm:$0xf]
      %v309 = vld [vmem:[%s271 + $0x30] sm:$0xf]
      %v310 = vld [vmem:[%s271 + $0x34] sm:$0xf]
      %v311 = vld [vmem:[%s271 + $0x38] sm:$0xf]
      %v312 = vld [vmem:[%s271 + $0x3c] sm:$0xf]
      %v313 = vld [vmem:[%s2] sm:$0xf]
      %v314 = vld [vmem:[%s2 + $0x4] sm:$0xf]
      %v315 = vld [vmem:[%s3] sm:$0x1]
      %v317 = vlaneseq
      %v318 = vshrl.u32 %v317, 7
      %v319 = vsub.s32 0, %v318
      %v320 = vrot.slane %v315, %v319
      %v338 = vunpack.c.l.b16 %v297
      %v339 = vunpack.c.l.b16 %v298
      %v340 = vunpack.c.l.b16 %v299
      %v341 = vunpack.c.l.b16 %v300
      %v342 = vunpack.c.l.b16 %v301
      %v343 = vunpack.c.l.b16 %v302
      %v344 = vunpack.c.l.b16 %v303
      %v345 = vunpack.c.l.b16 %v304
      %v346 = vunpack.c.l.b16 %v305
      %v347 = vunpack.c.l.b16 %v306
      %v348 = vunpack.c.l.b16 %v307
      %v349 = vunpack.c.l.b16 %v308
      %v350 = vunpack.c.l.b16 %v309
      %v351 = vunpack.c.l.b16 %v310
      %v352 = vunpack.c.l.b16 %v311
      %v353 = vunpack.c.l.b16 %v312
      %v354 = vpack.c.b16 %v339, %v338
      %v355 = vpack.c.b16 %v341, %v340
      %v356 = vpack.c.b16 %v343, %v342
      %v357 = vpack.c.b16 %v345, %v344
      %v358 = vpack.c.b16 %v347, %v346
      %v359 = vpack.c.b16 %v349, %v348
      %v360 = vpack.c.b16 %v351, %v350
      %v361 = vpack.c.b16 %v353, %v352
      %v364 = vunpack.c.l.b16 %v313
      %v365 = vunpack.c.l.b16 %v314
      %v366 = vpack.c.b16 %v365, %v364
      %vm368 = vcmask 130048
      %v370 = vsel %vm368, %v354, 0
      %v373 = vsel %vm368, %v355, 0
      %v376 = vsel %vm368, %v356, 0
      %v379 = vsel %vm368, %v357, 0
      %v382 = vsel %vm368, %v358, 0
      %v385 = vsel %vm368, %v359, 0
      %v388 = vsel %vm368, %v360, 0
      %v391 = vsel %vm368, %v361, 0
      %393 = vmatprep.subr.bf16.mxu0 0
      %394 = vmatpush1.bf16.msra.mxu0 %v366
      %395 = vmatprep.subr.bf16.mxu0 0
      %396 = vmatpush1.bf16.msra.mxu0 0
      %397 = vmatprep.subr.bf16.mxu0 0
      %398 = vmatpush1.bf16.msra.mxu0 0
      %399 = vmatprep.subr.bf16.mxu0 0
      %400 = vmatpush1.bf16.msra.mxu0 0
      %401 = vmatprep.subr.bf16.mxu0 0
      %402 = vmatpush1.bf16.msra.mxu0 0
      %403 = vmatprep.subr.bf16.mxu0 0
      %404 = vmatpush1.bf16.msra.mxu0 0
      %405 = vmatprep.subr.bf16.mxu0 0
      %406 = vmatpush1.bf16.msra.mxu0 0
      %407 = vmatprep.subr.bf16.mxu0 0
      %408 = vmatpush1.bf16.msra.mxu0 0
      %409 = vmatprep.subr.bf16.mxu0 0
      %410 = vmatpush1.bf16.msra.mxu0 0
      %411 = vmatprep.subr.bf16.mxu0 0
      %412 = vmatpush1.bf16.msra.mxu0 0
      %413 = vmatprep.subr.bf16.mxu0 0
      %414 = vmatpush1.bf16.msra.mxu0 0
      %415 = vmatprep.subr.bf16.mxu0 0
      %416 = vmatpush1.bf16.msra.mxu0 0
      %417 = vmatprep.subr.bf16.mxu0 0
      %418 = vmatpush1.bf16.msra.mxu0 0
      %419 = vmatprep.subr.bf16.mxu0 0
      %420 = vmatpush1.bf16.msra.mxu0 0
      %421 = vmatprep.subr.bf16.mxu0 0
      %422 = vmatpush1.bf16.msra.mxu0 0
      %423 = vmatprep.subr.bf16.mxu0 0
      %424 = vmatpush1.bf16.msra.mxu0 0
      %425 = vmatprep.mubr.bf16.mxu0 0
      %426 = vmatmul.mubr.bf16.gmra.mrb[0].mxu0 %v370
      %v427 = vpop.f32.mrb[0].mxu0
      %v428 = vadd.f32 %v320, %v427
      %v429 = vpop.f32.mrb[0].mxu0
      %v430 = vpop.f32.mrb[0].mxu0
      %v431 = vadd.f32 %v320, %v430
      %v432 = vpop.f32.mrb[0].mxu0
      %433 = vmatprep.mubr.bf16.mxu0 0
      %434 = vmatmul.mubr.bf16.gmra.mrb[0].mxu0 %v373
      %v435 = vpop.f32.mrb[0].mxu0
      %v436 = vadd.f32 %v320, %v435
      %v437 = vpop.f32.mrb[0].mxu0
      %v438 = vpop.f32.mrb[0].mxu0
      %v439 = vadd.f32 %v320, %v438
      %v440 = vpop.f32.mrb[0].mxu0
      %441 = vmatprep.mubr.bf16.mxu0 0
      %442 = vmatmul.mubr.bf16.gmra.mrb[0].mxu0 %v376
      %v443 = vpop.f32.mrb[0].mxu0
      %v444 = vadd.f32 %v320, %v443
      %v445 = vpop.f32.mrb[0].mxu0
      %v446 = vpop.f32.mrb[0].mxu0
      %v447 = vadd.f32 %v320, %v446
      %v448 = vpop.f32.mrb[0].mxu0
      %449 = vmatprep.mubr.bf16.mxu0 0
      %450 = vmatmul.mubr.bf16.gmra.mrb[0].mxu0 %v379
      %v451 = vpop.f32.mrb[0].mxu0
      %v452 = vadd.f32 %v320, %v451
      %v453 = vpop.f32.mrb[0].mxu0
      %v454 = vpop.f32.mrb[0].mxu0
      %v455 = vadd.f32 %v320, %v454
      %v456 = vpop.f32.mrb[0].mxu0
      %457 = vmatprep.mubr.bf16.mxu0 0
      %458 = vmatmul.mubr.bf16.gmra.mrb[0].mxu0 %v382
      %v459 = vpop.f32.mrb[0].mxu0
      %v460 = vadd.f32 %v320, %v459
      %v461 = vpop.f32.mrb[0].mxu0
      %v462 = vpop.f32.mrb[0].mxu0
      %v463 = vadd.f32 %v320, %v462
      %v464 = vpop.f32.mrb[0].mxu0
      %465 = vmatprep.mubr.bf16.mxu0 0
      %466 = vmatmul.mubr.bf16.gmra.mrb[0].mxu0 %v385
      %v467 = vpop.f32.mrb[0].mxu0
      %v468 = vadd.f32 %v320, %v467
      %v469 = vpop.f32.mrb[0].mxu0
      %v470 = vpop.f32.mrb[0].mxu0
      %v471 = vadd.f32 %v320, %v470
      %v472 = vpop.f32.mrb[0].mxu0
      %473 = vmatprep.mubr.bf16.mxu0 0
      %474 = vmatmul.mubr.bf16.gmra.mrb[0].mxu0 %v388
      %v475 = vpop.f32.mrb[0].mxu0
      %v476 = vadd.f32 %v320, %v475
      %v477 = vpop.f32.mrb[0].mxu0
      %v478 = vpop.f32.mrb[0].mxu0
      %v479 = vadd.f32 %v320, %v478
      %v480 = vpop.f32.mrb[0].mxu0
      %481 = vmatprep.mubr.bf16.mxu0 0
      %482 = vmatmul.mubr.bf16.gmra.mrb[0].mxu0 %v391
      %v483 = vpop.f32.mrb[0].mxu0
      %v484 = vadd.f32 %v320, %v483
      %v485 = vpop.f32.mrb[0].mxu0
      %v486 = vpop.f32.mrb[0].mxu0
      %v487 = vadd.f32 %v320, %v486
      %v488 = vpop.f32.mrb[0].mxu0
      %489 = vdwg.mxu0
      %v490 = vld [vmem:[%s281] sm:$0xf]
      %v491 = vld [vmem:[%s281 + $0x4] sm:$0xf]
      %v492 = vld [vmem:[%s281 + $0x8] sm:$0xf]
      %v493 = vld [vmem:[%s281 + $0xc] sm:$0xf]
      %v494 = vld [vmem:[%s281 + $0x10] sm:$0xf]
      %v495 = vld [vmem:[%s281 + $0x14] sm:$0xf]
      %v496 = vld [vmem:[%s281 + $0x18] sm:$0xf]
      %v497 = vld [vmem:[%s281 + $0x1c] sm:$0xf]
      %v498 = vld [vmem:[%s281 + $0x20] sm:$0xf]
      %v499 = vld [vmem:[%s281 + $0x24] sm:$0xf]
      %v500 = vld [vmem:[%s281 + $0x28] sm:$0xf]
      %v501 = vld [vmem:[%s281 + $0x2c] sm:$0xf]
      %v502 = vld [vmem:[%s281 + $0x30] sm:$0xf]
      %v503 = vld [vmem:[%s281 + $0x34] sm:$0xf]
      %v504 = vld [vmem:[%s281 + $0x38] sm:$0xf]
      %v505 = vld [vmem:[%s281 + $0x3c] sm:$0xf]
      %v506 = vunpack.c.l.bf16 %v490
      %v507 = vunpack.c.l.bf16 %v491
      %v508 = vunpack.c.l.bf16 %v492
      %v509 = vunpack.c.l.bf16 %v493
      %v510 = vunpack.c.l.bf16 %v494
      %v511 = vunpack.c.l.bf16 %v495
      %v512 = vunpack.c.l.bf16 %v496
      %v513 = vunpack.c.l.bf16 %v497
      %v514 = vunpack.c.l.bf16 %v498
      %v515 = vunpack.c.l.bf16 %v499
      %v516 = vunpack.c.l.bf16 %v500
      %v517 = vunpack.c.l.bf16 %v501
      %v518 = vunpack.c.l.bf16 %v502
      %v519 = vunpack.c.l.bf16 %v503
      %v520 = vunpack.c.l.bf16 %v504
      %v521 = vunpack.c.l.bf16 %v505
      %v522 = vadd.f32 %v428, %v506
      %v523 = vadd.f32 %v431, %v507
      %v524 = vadd.f32 %v436, %v508
      %v525 = vadd.f32 %v439, %v509
      %v526 = vadd.f32 %v444, %v510
      %v527 = vadd.f32 %v447, %v511
      %v528 = vadd.f32 %v452, %v512
      %v529 = vadd.f32 %v455, %v513
      %v530 = vadd.f32 %v460, %v514
      %v531 = vadd.f32 %v463, %v515
      %v532 = vadd.f32 %v468, %v516
      %v533 = vadd.f32 %v471, %v517
      %v534 = vadd.f32 %v476, %v518
      %v535 = vadd.f32 %v479, %v519
      %v536 = vadd.f32 %v484, %v520
      %v537 = vadd.f32 %v487, %v521
      %v538 = vpack.c.bf16 %v523, %v522
      %v539 = vpack.c.bf16 %v525, %v524
      %v540 = vpack.c.bf16 %v527, %v526
      %v541 = vpack.c.bf16 %v529, %v528
      %v542 = vpack.c.bf16 %v531, %v530
      %v543 = vpack.c.bf16 %v533, %v532
      %v544 = vpack.c.bf16 %v535, %v534
      %v545 = vpack.c.bf16 %v537, %v536
      %v546 = vld [vmem:[%s4] sm:$0xf]
      %vm547 = vcmask 261120
      %v549 = vsel %vm547, %v546, 0
      %v552 = vsel %vm547, %v538, 0
      %v555 = vsel %vm547, %v539, 0
      %v558 = vsel %vm547, %v540, 0
      %v561 = vsel %vm547, %v541, 0
      %v564 = vsel %vm547, %v542, 0
      %v567 = vsel %vm547, %v543, 0
      %v570 = vsel %vm547, %v544, 0
      %v573 = vsel %vm547, %v545, 0
      %575 = vmatprep.subr.bf16.mxu0 0
      %576 = vmatpush1.bf16.xpose.msra.mxu0 %v552
      %577 = vmatprep.subr.bf16.mxu0 0
      %578 = vmatpush1.bf16.xpose.msra.mxu0 %v555
      %579 = vmatprep.subr.bf16.mxu0 0
      %580 = vmatpush1.bf16.xpose.msra.mxu0 %v558
      %581 = vmatprep.subr.bf16.mxu0 0
      %582 = vmatpush1.bf16.xpose.msra.mxu0 %v561
      %583 = vmatprep.subr.bf16.mxu0 0
      %584 = vmatpush1.bf16.xpose.msra.mxu0 %v564
      %585 = vmatprep.subr.bf16.mxu0 0
      %586 = vmatpush1.bf16.xpose.msra.mxu0 %v567
      %587 = vmatprep.subr.bf16.mxu0 0
      %588 = vmatpush1.bf16.xpose.msra.mxu0 %v570
      %589 = vmatprep.subr.bf16.mxu0 0
      %590 = vmatpush1.bf16.xpose.msra.mxu0 %v573
      %591 = vmatprep.subr.bf16.mxu0 0
      %592 = vmatpush1.bf16.xpose.msra.mxu0 0
      %593 = vmatprep.subr.bf16.mxu0 0
      %594 = vmatpush1.bf16.xpose.msra.mxu0 0
      %595 = vmatprep.subr.bf16.mxu0 0
      %596 = vmatpush1.bf16.xpose.msra.mxu0 0
      %597 = vmatprep.subr.bf16.mxu0 0
      %598 = vmatpush1.bf16.xpose.msra.mxu0 0
      %599 = vmatprep.subr.bf16.mxu0 0
      %600 = vmatpush1.bf16.xpose.msra.mxu0 0
      %601 = vmatprep.subr.bf16.mxu0 0
      %602 = vmatpush1.bf16.xpose.msra.mxu0 0
      %603 = vmatprep.subr.bf16.mxu0 0
      %604 = vmatpush1.bf16.xpose.msra.mxu0 0
      %605 = vmatprep.subr.bf16.mxu0 0
      %606 = vmatpush1.bf16.xpose.msra.mxu0 0
      %607 = vmatprep.mubr.bf16.mxu0 0
      %608 = vmatmul.mubr.bf16.gmra.mrb[0].mxu0 %v549
      %v609 = vpop.f32.mrb[0].mxu0
      %v610 = vadd.f32 0.0, %v609
      %v611 = vpop.f32.mrb[0].mxu0
      %v612 = vpop.f32.mrb[0].mxu0
      %v613 = vpop.f32.mrb[0].mxu0
      %614 = vdwg.mxu0
      %v615 = vld [vmem:[#allocation2] sm:$0xff]
      %616 = vmax.xlane.f32.xlu0 %v610
      %v617 = vpop.xlane.xlu0 %616
      %v618 = vmax.f32 %v615, %v617
      %v619 = vsub.f32 %v615, %v618
      %v620 = vmul.f32 %v619, 1.442695
      %v621 = vpow.pop %v620
      %623 = vset.pattern.permute.xlu0 0
      %624 = vperm.xlu0 %623, %v618
      %v625 = vpop.permute.xlu0 %624
      %v627 = vsub.f32 %v610, %v625
      %v628 = vmul.f32 %v627, 1.442695
      %v629 = vpow.pop %v628
      %v630 = vld [vmem:[#allocation3] sm:$0xff]
      %v631 = vmul.f32 %v621, %v630
      %632 = vadd.xlane.f32.xlu0 %v629
      %v633 = vpop.xlane.xlu0 %632
      %v634 = vadd.f32 %v631, %v633
      %vm635 = vcmask 7168
      %636 = vst.msk [vmem:[#allocation3] sm:$0xff] %vm635, %v634
      %v637 = vld [vmem:[#allocation4] sm:$0xff]
      %639 = vset.pattern.permute.xlu0 0
      %640 = vperm.xlu0 %639, %v621
      %v641 = vpop.permute.xlu0 %640
      %v643 = vmul.f32 %v641, %v637
      %v644 = vpack.c.bf16 %v629, %v629
      %v645 = vpack.c.bf16 %v431, %v428
      %v646 = vpack.c.bf16 %v439, %v436
      %v647 = vpack.c.bf16 %v447, %v444
      %v648 = vpack.c.bf16 %v455, %v452
      %v649 = vpack.c.bf16 %v463, %v460
      %v650 = vpack.c.bf16 %v471, %v468
      %v651 = vpack.c.bf16 %v479, %v476
      %v652 = vpack.c.bf16 %v487, %v484
      %653 = vmatprep.subr.bf16.mxu0 0
      %654 = vmatpush1.bf16.msra.mxu0 %v645
      %655 = vmatprep.subr.bf16.mxu0 0
      %656 = vmatpush1.bf16.msra.mxu0 %v646
      %657 = vmatprep.subr.bf16.mxu0 0
      %658 = vmatpush1.bf16.msra.mxu0 %v647
      %659 = vmatprep.subr.bf16.mxu0 0
      %660 = vmatpush1.bf16.msra.mxu0 %v648
      %661 = vmatprep.subr.bf16.mxu0 0
      %662 = vmatpush1.bf16.msra.mxu0 %v649
      %663 = vmatprep.subr.bf16.mxu0 0
      %664 = vmatpush1.bf16.msra.mxu0 %v650
      %665 = vmatprep.subr.bf16.mxu0 0
      %666 = vmatpush1.bf16.msra.mxu0 %v651
      %667 = vmatprep.subr.bf16.mxu0 0
      %668 = vmatpush1.bf16.msra.mxu0 %v652
      %669 = vmatprep.subr.bf16.mxu0 0
      %670 = vmatpush1.bf16.msra.mxu0 0
      %671 = vmatprep.subr.bf16.mxu0 0
      %672 = vmatpush1.bf16.msra.mxu0 0
      %673 = vmatprep.subr.bf16.mxu0 0
      %674 = vmatpush1.bf16.msra.mxu0 0
      %675 = vmatprep.subr.bf16.mxu0 0
      %676 = vmatpush1.bf16.msra.mxu0 0
      %677 = vmatprep.subr.bf16.mxu0 0
      %678 = vmatpush1.bf16.msra.mxu0 0
      %679 = vmatprep.subr.bf16.mxu0 0
      %680 = vmatpush1.bf16.msra.mxu0 0
      %681 = vmatprep.subr.bf16.mxu0 0
      %682 = vmatpush1.bf16.msra.mxu0 0
      %683 = vmatprep.subr.bf16.mxu0 0
      %684 = vmatpush1.bf16.msra.mxu0 0
      %685 = vmatprep.mubr.bf16.mxu0 0
      %686 = vmatmul.mubr.bf16.gmra.mrb[0].mxu0 %v644
      %v687 = vpop.f32.mrb[0].mxu0
      %v688 = vadd.f32 0.0, %v687
      %v689 = vpop.f32.mrb[0].mxu0
      %v690 = vpop.f32.mrb[0].mxu0
      %v691 = vpop.f32.mrb[0].mxu0
      %692 = vdwg.mxu0
      %v693 = vadd.f32 %v643, %v688
      %694 = vst.msk [vmem:[#allocation4] sm:$0xff] %vm547, %v693
      %695 = vst.msk [vmem:[#allocation2] sm:$0xff] %vm635, %v618
      %p696 = scmp.eq.s32.totalorder %s21, 1
      // Predicated region
      $region45: #{lemodel_vib_forward.2} parent=39 // pred_check
        %p697 = pneg %p696
      $region46: #{lemodel_vib_forward.2} parent=39 // pred_check_branch
        %699 = sbr.rel (%p697) target = $region48
      $region47: #{lemodel_vib_forward.2} parent=39 // pred_region
        %v700 = vld [vmem:[#allocation4] sm:$0xff]
        %v701 = vld [vmem:[#allocation3] sm:$0xff]
        %v702 = vrcp.pop %v701
        %704 = vset.pattern.permute.xlu0 0
        %705 = vperm.xlu0 %704, %v702
        %v706 = vpop.permute.xlu0 %705
        %v708 = vmul.f32 %v700, %v706
        %709 = vst.msk [vmem:[%s286] sm:$0xff] %vm547, %v708
      $region48: #{lemodel_vib_forward.2} parent=39 // pred_fallthru
        _
      %p710 = scmp.lt.s32.totalorder %s20, 1
      %s711 = scalar_select %p710, %s20, 1
      %s712 = smul.addr %s711, 8
      %s713 = scalar_lea.vmem %s5, %s712
      // Predicated region
      $region49: #{lemodel_vib_forward.2} parent=39 // pred_check
        %p714 = pneg %p165
      $region50: #{lemodel_vib_forward.2} parent=39 // pred_check_branch
        %716 = sbr.rel (%p714) target = $region52
      $region51: #{lemodel_vib_forward.2} parent=39 // pred_region
        _
      $region52: #{lemodel_vib_forward.2} parent=39 // pred_fallthru
        _
    $region40: #{lemodel_vib_forward.2} parent=5 // pred_fallthru
      _
    %p717 = scmp.le.s32.totalorder 2, %s11
    // Predicated region
    $region53: #{lemodel_vib_forward.2} parent=5 // pred_check
      %p718 = pneg %p717
    $region54: #{lemodel_vib_forward.2} parent=5 // pred_check_branch
      %720 = sbr.rel (%p718) target = $region56
    $region55: #{lemodel_vib_forward.2} parent=5 // pred_region
      %s721 = ssub.s32 %s11, 2
      // Predicated region
      $region57: #{lemodel_vib_forward.2} parent=55 // pred_check
        %p722 = pneg %p171
      $region58: #{lemodel_vib_forward.2} parent=55 // pred_check_branch
        %724 = sbr.rel (%p722) target = $region60
      $region59: #{lemodel_vib_forward.2} parent=55 // pred_region
        %p725 = scmp.lt.s32.totalorder %s22, 1
        %s726 = scalar_select %p725, %s22, 1
        %s727 = smul.addr %s726, 8
        %s728 = scalar_lea.vmem %s5, %s727
      $region60: #{lemodel_vib_forward.2} parent=55 // pred_fallthru
        _
    $region56: #{lemodel_vib_forward.2} parent=5 // pred_fallthru
      _
  $region6: #{lemodel_vib_forward.2} parent=0 // loop_footer
    %s15 = sadd.s32 1, %s11
  $region7: #{lemodel_vib_forward.2} parent=0 // loop_footer_branch
    %10 = sbr.rel target = $region3
  $region8: #{lemodel_vib_forward.2} parent=0 // loop_exit
    _

// kernel: lemodel_vib_forward.3
$region0: #{lemodel_vib_forward.3}
  #allocation0 [shape = 'u32[]', space=smem, size = 0x4, offset = 0x4, fixed_abs, tag = 'smem constant byte address 0x4 - core index']
  #allocation1 [shape = 'u32[144,128]{1,0:T(1,128)}', space=vmem, size = 0x12000, scoped, tag = 'internal scratch']
  %s0 = inlined_call_operand.vmem [shape: f32[2,8,32], index: 0, kind: input, shape index: {}]
  %s1 = inlined_call_operand.vmem [shape: f32[2,8,128], index: 1, kind: input, shape index: {}]
  %s2 = inlined_call_operand.vmem [shape: bf16[32,32], index: 2, kind: input, shape index: {}]
  %s3 = inlined_call_operand.vmem [shape: f32[1,32], index: 3, kind: input, shape index: {}]
  %s4 = inlined_call_operand.vmem [shape: bf16[32,128], index: 4, kind: input, shape index: {}]
  %s5 = inlined_call_operand.vmem [shape: f32[1,128], index: 5, kind: input, shape index: {}]
  %s6 = inlined_call_operand.vmem [shape: bf16[32,128], index: 6, kind: input, shape index: {}]
  %s7 = inlined_call_operand.vmem [shape: f32[1,128], index: 7, kind: input, shape index: {}]
  %s8 = inlined_call_operand.vmem [shape: f32[8,128], index: 8, kind: input, shape index: {}]
  %s9 = inlined_call_operand.vmem [shape: f32[1,8], index: 9, kind: input, shape index: {}]
  %s10 = inlined_call_operand.hbm [shape: f32[2,8], index: 10, kind: output, shape index: {0}]
  %s11 = inlined_call_operand.hbm [shape: f32[2,8,128], index: 11, kind: output, shape index: {1}]
  %s12 = inlined_call_operand.hbm [shape: f32[2,8,128], index: 12, kind: output, shape index: {2}]
  %13 = xla_tuple %s10, %s11, %s12
  %s14 = sld [smem:[#allocation0]]
  $region66: #{lemodel_vib_forward.3} parent=0
    _
  %s16 = ssub.s32 1, %s14
  %s17 = scalar_select 0, %s16, %s14
  $region1: #{lemodel_vib_forward.3} parent=0
    #allocation2 [shape = 'u8[1024]{0}', space=vmem, size = 0x400, scoped, tag = 'output window, operand 0, single buffered']
    #allocation3 [shape = 's32[1]{0}', space=sflag, size = 0x4, scoped, tag = 'scoped memory for lemodel_vib_forward.3']
    #allocation4 [shape = 'u8[8192]{0}', space=vmem, size = 0x2000, scoped, tag = 'output window, operand 1, single buffered']
    #allocation5 [shape = 's32[1]{0}', space=sflag, size = 0x4, scoped, tag = 'scoped memory for lemodel_vib_forward.3']
    #allocation6 [shape = 'u8[8192]{0}', space=vmem, size = 0x2000, scoped, tag = 'output window, operand 2, single buffered']
    %18 = vsyncpa [#allocation3], 0
    %19 = vsyncpa [#allocation5], 0
    // Predicated region
    $region2: #{lemodel_vib_forward.3} parent=1 // pred_check
      _
    $region3: #{lemodel_vib_forward.3} parent=1 // pred_check_branch
      %21 = sbr.rel (0) target = $region5
    $region4: #{lemodel_vib_forward.3} parent=1 // pred_region
      _
    $region5: #{lemodel_vib_forward.3} parent=1 // pred_fallthru
      _
    // Predicated region
    $region6: #{lemodel_vib_forward.3} parent=1 // pred_check
      _
    $region7: #{lemodel_vib_forward.3} parent=1 // pred_check_branch
      %23 = sbr.rel (0) target = $region9
    $region8: #{lemodel_vib_forward.3} parent=1 // pred_region
      _
    $region9: #{lemodel_vib_forward.3} parent=1 // pred_fallthru
      _
    // Predicated region
    $region10: #{lemodel_vib_forward.3} parent=1 // pred_check
      _
    $region11: #{lemodel_vib_forward.3} parent=1 // pred_check_branch
      %25 = sbr.rel (0) target = $region13
    $region12: #{lemodel_vib_forward.3} parent=1 // pred_region
      _
    $region13: #{lemodel_vib_forward.3} parent=1 // pred_fallthru
      _
    // Predicated region
    $region14: #{lemodel_vib_forward.3} parent=1 // pred_check
      _
    $region15: #{lemodel_vib_forward.3} parent=1 // pred_check_branch
      %27 = sbr.rel (0) target = $region17
    $region16: #{lemodel_vib_forward.3} parent=1 // pred_region
      _
    $region17: #{lemodel_vib_forward.3} parent=1 // pred_fallthru
      _
    // Predicated region
    $region18: #{lemodel_vib_forward.3} parent=1 // pred_check
      _
    $region19: #{lemodel_vib_forward.3} parent=1 // pred_check_branch
      %29 = sbr.rel (0) target = $region21
    $region20: #{lemodel_vib_forward.3} parent=1 // pred_region
      _
    $region21: #{lemodel_vib_forward.3} parent=1 // pred_fallthru
      _
    // Predicated region
    $region22: #{lemodel_vib_forward.3} parent=1 // pred_check
      _
    $region23: #{lemodel_vib_forward.3} parent=1 // pred_check_branch
      %31 = sbr.rel (0) target = $region25
    $region24: #{lemodel_vib_forward.3} parent=1 // pred_region
      _
    $region25: #{lemodel_vib_forward.3} parent=1 // pred_fallthru
      _
    // Predicated region
    $region26: #{lemodel_vib_forward.3} parent=1 // pred_check
      _
    $region27: #{lemodel_vib_forward.3} parent=1 // pred_check_branch
      %33 = sbr.rel (0) target = $region29
    $region28: #{lemodel_vib_forward.3} parent=1 // pred_region
      _
    $region29: #{lemodel_vib_forward.3} parent=1 // pred_fallthru
      _
    // Predicated region
    $region30: #{lemodel_vib_forward.3} parent=1 // pred_check
      _
    $region31: #{lemodel_vib_forward.3} parent=1 // pred_check_branch
      %35 = sbr.rel (0) target = $region33
    $region32: #{lemodel_vib_forward.3} parent=1 // pred_region
      _
    $region33: #{lemodel_vib_forward.3} parent=1 // pred_fallthru
      _
    // Predicated region
    $region34: #{lemodel_vib_forward.3} parent=1 // pred_check
      _
    $region35: #{lemodel_vib_forward.3} parent=1 // pred_check_branch
      %37 = sbr.rel (0) target = $region37
    $region36: #{lemodel_vib_forward.3} parent=1 // pred_region
      _
    $region37: #{lemodel_vib_forward.3} parent=1 // pred_fallthru
      _
    // Predicated region
    $region38: #{lemodel_vib_forward.3} parent=1 // pred_check
      _
    $region39: #{lemodel_vib_forward.3} parent=1 // pred_check_branch
      %39 = sbr.rel (0) target = $region41
    $region40: #{lemodel_vib_forward.3} parent=1 // pred_region
      _
    $region41: #{lemodel_vib_forward.3} parent=1 // pred_fallthru
      _
    %v41 = vld [vmem:[%s0] sm:$0xff]
    %v42 = vld [vmem:[%s0 + $0x8] sm:$0xff]
    %v43 = vpack.c.bf16 %v42, %v41
    %v44 = vld [vmem:[%s2] sm:$0xf]
    %v45 = vld [vmem:[%s2 + $0x4] sm:$0xf]
    %v46 = vld [vmem:[%s2 + $0x8] sm:$0xf]
    %v47 = vld [vmem:[%s2 + $0xc] sm:$0xf]
    %v48 = vld [vmem:[%s3] sm:$0x1]
    %v50 = vlaneseq
    %v51 = vshrl.u32 %v50, 7
    %v52 = vsub.s32 0, %v51
    %v53 = vrot.slane %v48, %v52
    %v59 = vunpack.c.l.b16 %v44
    %v60 = vunpack.c.l.b16 %v45
    %v61 = vunpack.c.l.b16 %v46
    %v62 = vunpack.c.l.b16 %v47
    %v63 = vpack.c.b16 %v60, %v59
    %v64 = vpack.c.b16 %v62, %v61
    %vm67 = vcmask 261120
    %v69 = vsel %vm67, %v43, 0
    %71 = vmatprep.subr.bf16.mxu0 0
    %72 = vmatpush1.bf16.msra.mxu0 %v63
    %73 = vmatprep.subr.bf16.mxu0 0
    %74 = vmatpush1.bf16.msra.mxu0 %v64
    %75 = vmatprep.subr.bf16.mxu0 0
    %76 = vmatpush1.bf16.msra.mxu0 0
    %77 = vmatprep.subr.bf16.mxu0 0
    %78 = vmatpush1.bf16.msra.mxu0 0
    %79 = vmatprep.subr.bf16.mxu0 0
    %80 = vmatpush1.bf16.msra.mxu0 0
    %81 = vmatprep.subr.bf16.mxu0 0
    %82 = vmatpush1.bf16.msra.mxu0 0
    %83 = vmatprep.subr.bf16.mxu0 0
    %84 = vmatpush1.bf16.msra.mxu0 0
    %85 = vmatprep.subr.bf16.mxu0 0
    %86 = vmatpush1.bf16.msra.mxu0 0
    %87 = vmatprep.subr.bf16.mxu0 0
    %88 = vmatpush1.bf16.msra.mxu0 0
    %89 = vmatprep.subr.bf16.mxu0 0
    %90 = vmatpush1.bf16.msra.mxu0 0
    %91 = vmatprep.subr.bf16.mxu0 0
    %92 = vmatpush1.bf16.msra.mxu0 0
    %93 = vmatprep.subr.bf16.mxu0 0
    %94 = vmatpush1.bf16.msra.mxu0 0
    %95 = vmatprep.subr.bf16.mxu0 0
    %96 = vmatpush1.bf16.msra.mxu0 0
    %97 = vmatprep.subr.bf16.mxu0 0
    %98 = vmatpush1.bf16.msra.mxu0 0
    %99 = vmatprep.subr.bf16.mxu0 0
    %100 = vmatpush1.bf16.msra.mxu0 0
    %101 = vmatprep.subr.bf16.mxu0 0
    %102 = vmatpush1.bf16.msra.mxu0 0
    %103 = vmatprep.mubr.bf16.mxu0 0
    %104 = vmatmul.mubr.bf16.gmra.mrb[0].mxu0 %v69
    %v105 = vpop.f32.mrb[0].mxu0
    %v106 = vadd.f32 %v53, %v105
    %v107 = vpop.f32.mrb[0].mxu0
    %v108 = vpop.f32.mrb[0].mxu0
    %v109 = vadd.f32 %v53, %v108
    %v110 = vpop.f32.mrb[0].mxu0
    %111 = vdwg.mxu0
    %v112 = vmax.f32 %v106, 0.0
    %v113 = vmax.f32 %v109, 0.0
    %v114 = vpack.c.bf16 %v113, %v112
    %v115 = vld [vmem:[%s4] sm:$0xf]
    %v116 = vld [vmem:[%s4 + $0x4] sm:$0xf]
    %v117 = vld [vmem:[%s4 + $0x8] sm:$0xf]
    %v118 = vld [vmem:[%s4 + $0xc] sm:$0xf]
    %v119 = vld [vmem:[%s5] sm:$0x1]
    %v121 = vlaneseq
    %v122 = vshrl.u32 %v121, 7
    %v123 = vsub.s32 0, %v122
    %v124 = vrot.slane %v119, %v123
    %v130 = vunpack.c.l.b16 %v115
    %v131 = vunpack.c.l.b16 %v116
    %v132 = vunpack.c.l.b16 %v117
    %v133 = vunpack.c.l.b16 %v118
    %v134 = vpack.c.b16 %v131, %v130
    %v135 = vpack.c.b16 %v133, %v132
    %v139 = vsel %vm67, %v114, 0
    %141 = vmatprep.subr.bf16.mxu0 0
    %142 = vmatpush1.bf16.msra.mxu0 %v134
    %143 = vmatprep.subr.bf16.mxu0 0
    %144 = vmatpush1.bf16.msra.mxu0 %v135
    %145 = vmatprep.subr.bf16.mxu0 0
    %146 = vmatpush1.bf16.msra.mxu0 0
    %147 = vmatprep.subr.bf16.mxu0 0
    %148 = vmatpush1.bf16.msra.mxu0 0
    %149 = vmatprep.subr.bf16.mxu0 0
    %150 = vmatpush1.bf16.msra.mxu0 0
    %151 = vmatprep.subr.bf16.mxu0 0
    %152 = vmatpush1.bf16.msra.mxu0 0
    %153 = vmatprep.subr.bf16.mxu0 0
    %154 = vmatpush1.bf16.msra.mxu0 0
    %155 = vmatprep.subr.bf16.mxu0 0
    %156 = vmatpush1.bf16.msra.mxu0 0
    %157 = vmatprep.subr.bf16.mxu0 0
    %158 = vmatpush1.bf16.msra.mxu0 0
    %159 = vmatprep.subr.bf16.mxu0 0
    %160 = vmatpush1.bf16.msra.mxu0 0
    %161 = vmatprep.subr.bf16.mxu0 0
    %162 = vmatpush1.bf16.msra.mxu0 0
    %163 = vmatprep.subr.bf16.mxu0 0
    %164 = vmatpush1.bf16.msra.mxu0 0
    %165 = vmatprep.subr.bf16.mxu0 0
    %166 = vmatpush1.bf16.msra.mxu0 0
    %167 = vmatprep.subr.bf16.mxu0 0
    %168 = vmatpush1.bf16.msra.mxu0 0
    %169 = vmatprep.subr.bf16.mxu0 0
    %170 = vmatpush1.bf16.msra.mxu0 0
    %171 = vmatprep.subr.bf16.mxu0 0
    %172 = vmatpush1.bf16.msra.mxu0 0
    %173 = vmatprep.mubr.bf16.mxu0 0
    %174 = vmatmul.mubr.bf16.gmra.mrb[0].mxu0 %v139
    %v175 = vpop.f32.mrb[0].mxu0
    %v176 = vadd.f32 %v124, %v175
    %v177 = vpop.f32.mrb[0].mxu0
    %v178 = vpop.f32.mrb[0].mxu0
    %v179 = vadd.f32 %v124, %v178
    %v180 = vpop.f32.mrb[0].mxu0
    %181 = vdwg.mxu0
    %v182 = vld [vmem:[%s6] sm:$0xf]
    %v183 = vld [vmem:[%s6 + $0x4] sm:$0xf]
    %v184 = vld [vmem:[%s6 + $0x8] sm:$0xf]
    %v185 = vld [vmem:[%s6 + $0xc] sm:$0xf]
    %v186 = vld [vmem:[%s7] sm:$0x1]
    %v188 = vlaneseq
    %v189 = vshrl.u32 %v188, 7
    %v190 = vsub.s32 0, %v189
    %v191 = vrot.slane %v186, %v190
    %v197 = vunpack.c.l.b16 %v182
    %v198 = vunpack.c.l.b16 %v183
    %v199 = vunpack.c.l.b16 %v184
    %v200 = vunpack.c.l.b16 %v185
    %v201 = vpack.c.b16 %v198, %v197
    %v202 = vpack.c.b16 %v200, %v199
    %205 = vmatprep.subr.bf16.mxu0 0
    %206 = vmatpush1.bf16.msra.mxu0 %v201
    %207 = vmatprep.subr.bf16.mxu0 0
    %208 = vmatpush1.bf16.msra.mxu0 %v202
    %209 = vmatprep.subr.bf16.mxu0 0
    %210 = vmatpush1.bf16.msra.mxu0 0
    %211 = vmatprep.subr.bf16.mxu0 0
    %212 = vmatpush1.bf16.msra.mxu0 0
    %213 = vmatprep.subr.bf16.mxu0 0
    %214 = vmatpush1.bf16.msra.mxu0 0
    %215 = vmatprep.subr.bf16.mxu0 0
    %216 = vmatpush1.bf16.msra.mxu0 0
    %217 = vmatprep.subr.bf16.mxu0 0
    %218 = vmatpush1.bf16.msra.mxu0 0
    %219 = vmatprep.subr.bf16.mxu0 0
    %220 = vmatpush1.bf16.msra.mxu0 0
    %221 = vmatprep.subr.bf16.mxu0 0
    %222 = vmatpush1.bf16.msra.mxu0 0
    %223 = vmatprep.subr.bf16.mxu0 0
    %224 = vmatpush1.bf16.msra.mxu0 0
    %225 = vmatprep.subr.bf16.mxu0 0
    %226 = vmatpush1.bf16.msra.mxu0 0
    %227 = vmatprep.subr.bf16.mxu0 0
    %228 = vmatpush1.bf16.msra.mxu0 0
    %229 = vmatprep.subr.bf16.mxu0 0
    %230 = vmatpush1.bf16.msra.mxu0 0
    %231 = vmatprep.subr.bf16.mxu0 0
    %232 = vmatpush1.bf16.msra.mxu0 0
    %233 = vmatprep.subr.bf16.mxu0 0
    %234 = vmatpush1.bf16.msra.mxu0 0
    %235 = vmatprep.subr.bf16.mxu0 0
    %236 = vmatpush1.bf16.msra.mxu0 0
    %237 = vmatprep.mubr.bf16.mxu0 0
    %238 = vmatmul.mubr.bf16.gmra.mrb[0].mxu0 %v139
    %v239 = vpop.f32.mrb[0].mxu0
    %v240 = vadd.f32 %v191, %v239
    %v241 = vpop.f32.mrb[0].mxu0
    %v242 = vpop.f32.mrb[0].mxu0
    %v243 = vadd.f32 %v191, %v242
    %v244 = vpop.f32.mrb[0].mxu0
    %245 = vdwg.mxu0
    %v246 = vmax.f32 %v240, 0.0
    %v247 = vmax.f32 %v243, 0.0
    %v248 = vand.u32 2147483647, %v240
    %v249 = vand.u32 2147483647, %v243
    %v250 = vsub.f32 0.0, %v248
    %v251 = vsub.f32 0.0, %v249
    %v252 = vmul.f32 %v250, 1.442695
    %v253 = vpow.pop %v252
    %v254 = vmul.f32 %v251, 1.442695
    %v255 = vpow.pop %v254
    %v256 = vadd.f32 %v253, 1.0
    %v257 = vadd.f32 %v255, 1.0
    %v258 = vlog2.pop %v256
    %v259 = vmul.f32 %v258, 0.6931472
    %v260 = vlog2.pop %v257
    %v261 = vmul.f32 %v260, 0.6931472
    %v262 = vadd.f32 %v246, %v259
    %v263 = vadd.f32 %v247, %v261
    %v264 = vld [vmem:[%s1] sm:$0xff]
    %v265 = vld [vmem:[%s1 + $0x8] sm:$0xff]
    %v266 = vmul.f32 %v262, %v264
    %v267 = vmul.f32 %v263, %v265
    %v268 = vadd.f32 %v176, %v266
    %v269 = vadd.f32 %v179, %v267
    %270 = vst [vmem:[#allocation4] sm:$0xff] %v176
    %271 = vst [vmem:[#allocation4 + $0x8] sm:$0xff] %v179
    %272 = vst [vmem:[#allocation6] sm:$0xff] %v262
    %273 = vst [vmem:[#allocation6 + $0x8] sm:$0xff] %v263
    %v274 = vld [vmem:[%s8] sm:$0xff]
    %v275 = vmul.f32 %v274, %v268
    %v276 = vmul.f32 %v274, %v269
    %277 = vadd.xlane.f32.xlu0 %v275
    %v278 = vpop.xlane.xlu0 %277
    %279 = vadd.xlane.f32.xlu0 %v276
    %v280 = vpop.xlane.xlu0 %279
    %v281 = vld [vmem:[%s9] sm:$0x1]
    %v283 = vlaneseq
    %v284 = vshrl.u32 %v283, 7
    %v285 = vsub.s32 0, %v284
    %v286 = vrot.slane %v281, %v285
    %288 = vbcast.lane.b32.xlu0 %v286, 256
    %v289 = vpop.permute.xlu0 %288
    %v291 = vadd.f32 %v278, %v289
    %v292 = vadd.f32 %v280, %v289
    %295 = vset.pattern.permute.xlu0 0
    %296 = vperm.xlu0 %295, %v291
    %v297 = vpop.permute.xlu0 %296
    %298 = vset.pattern.permute.xlu0 0
    %299 = vperm.xlu0 %298, %v292
    %v300 = vpop.permute.xlu0 %299
    %v301 = vlaneseq
    %v302 = vand.u32 %v301, 127
    %v303 = vlaneseq
    %v304 = vshrl.u32 %v303, 7
    %v305 = vsub.s32 %v302, %v304
    %v306 = vrot.slane %v297, %v305
    %v307 = vlaneseq
    %v308 = vshrl.u32 %v307, 7
    %v309 = vsub.s32 %v302, %v308
    %v310 = vrot.slane %v300, %v309
    %vm311 = vcmask 1041409
    %v312 = vsel %vm311, %v310, %v306
    %vm314 = vcmask 58368
    %315 = vst.msk [vmem:[#allocation2] sm:$0x3] %vm314, %v312
    // Predicated region
    $region42: #{lemodel_vib_forward.3} parent=1 // pred_check
      _
    $region43: #{lemodel_vib_forward.3} parent=1 // pred_check_branch
      %317 = sbr.rel (0) target = $region45
    $region44: #{lemodel_vib_forward.3} parent=1 // pred_region
      %s319 = ssub.s32 32, 32
      %320 = vsyncadd [#allocation3], %s319
      %s322 = sshll.u32 [#allocation2], 4
      %s323 = int_to_ptr.vmem [resolvable:$true] %s322
      %325 = dma.vmem_to_hbm [thread:$0]  %s323, 32, %s10, [#allocation3]
    $region45: #{lemodel_vib_forward.3} parent=1 // pred_fallthru
      _
    // Predicated region
    $region46: #{lemodel_vib_forward.3} parent=1 // pred_check
      _
    $region47: #{lemodel_vib_forward.3} parent=1 // pred_check_branch
      %327 = sbr.rel (0) target = $region49
    $region48: #{lemodel_vib_forward.3} parent=1 // pred_region
      %s329 = ssub.s32 256, 256
      %330 = vsyncadd [#allocation5], %s329
      %s331 = sshll.u32 [#allocation4], 4
      %s332 = int_to_ptr.vmem [resolvable:$true] %s331
      %337 = dma.vmem_to_hbm [thread:$0]  %s332, 256, %s11, [#allocation5], 128, 128, 8
    $region49: #{lemodel_vib_forward.3} parent=1 // pred_fallthru
      _
    // Predicated region
    $region50: #{lemodel_vib_forward.3} parent=1 // pred_check
      _
    $region51: #{lemodel_vib_forward.3} parent=1 // pred_check_branch
      %339 = sbr.rel (0) target = $region53
    $region52: #{lemodel_vib_forward.3} parent=1 // pred_region
      %s341 = ssub.s32 256, 256
      %342 = vsyncadd [#allocation5], %s341
      %s343 = sshll.u32 [#allocation6], 4
      %s344 = int_to_ptr.vmem [resolvable:$true] %s343
      %349 = dma.vmem_to_hbm [thread:$0]  %s344, 256, %s12, [#allocation5], 128, 128, 8
    $region53: #{lemodel_vib_forward.3} parent=1 // pred_fallthru
      _
    // Predicated region
    $region54: #{lemodel_vib_forward.3} parent=1 // pred_check
      _
    $region55: #{lemodel_vib_forward.3} parent=1 // pred_check_branch
      %351 = sbr.rel (0) target = $region57
    $region56: #{lemodel_vib_forward.3} parent=1 // pred_region
      %352 = dma.done [#allocation3], 32
    $region57: #{lemodel_vib_forward.3} parent=1 // pred_fallthru
      _
    // Predicated region
    $region58: #{lemodel_vib_forward.3} parent=1 // pred_check
      _
    $region59: #{lemodel_vib_forward.3} parent=1 // pred_check_branch
      %354 = sbr.rel (0) target = $region61
    $region60: #{lemodel_vib_forward.3} parent=1 // pred_region
      %355 = dma.done [#allocation5], 256
    $region61: #{lemodel_vib_forward.3} parent=1 // pred_fallthru
      _
    // Predicated region
    $region62: #{lemodel_vib_forward.3} parent=1 // pred_check
      _
    $region63: #{lemodel_vib_forward.3} parent=1 // pred_check_branch
      %357 = sbr.rel (0) target = $region65
    $region64: #{lemodel_vib_forward.3} parent=1 // pred_region
      %358 = dma.done [#allocation5], 256
    $region65: #{lemodel_vib_forward.3} parent=1 // pred_fallthru
      _
    %359 = vsyncpa [#allocation3], 1
    %360 = vsyncpa [#allocation5], 1

</llo_original>
